<compile_context>
chip_gen: v7x
topology: tpu7x:2x2x1
jax: 0.10.0
libtpu: 0.0.40
codegen_flags: <defaults>
</compile_context>

<pallas_src>
import math
import functools

import jax
import jax.numpy as jnp
from jax.experimental import pallas as pl
from jax.experimental.pallas import tpu as pltpu

EPS = 1e-5  # nn.GroupNorm default eps

# Column layout of the packed per-channel vector array.
_GPRE, _BPRE, _G1, _BE1, _B1, _G2, _BE2, _BG, _B2S = range(9)


def _graph_res_block_kernel(
    x_ref, w1_ref, wgT_ref, adjT_ref, w2s_ref, vec_ref, out_ref,
    *, c_in, mid, c_out, groups_pre, groups_mid, bpg, v, has_skip,
):
    f32, bf16 = jnp.float32, jnp.bfloat16

    def gn_relu(y, gamma, beta, groups):
        """GroupNorm + ReLU over a per-sample (C, V) slab (f32 on the VPU)."""
        c = y.shape[0]
        cg = c // groups                      # always 8 for this module
        cnt = float(cg * v)
        yg = y.reshape(groups, cg, v)
        # sum and sum-of-squares off the same operand; reduce lanes, then sublanes
        s1 = jnp.sum(jnp.sum(yg, axis=2, keepdims=True), axis=1, keepdims=True)
        s2 = jnp.sum(jnp.sum(yg * yg, axis=2, keepdims=True), axis=1, keepdims=True)
        mean = s1 / cnt
        var = jnp.maximum(s2 / cnt - mean * mean, 0.0)
        yn = ((yg - mean) * jax.lax.rsqrt(var + EPS)).reshape(c, v)
        return jnp.maximum(yn * gamma + beta, 0.0)

    # Per-channel vectors (f32, sublane-major -> broadcast over lanes).
    gpre = vec_ref[0:c_in, _GPRE:_GPRE + 1]
    bpre = vec_ref[0:c_in, _BPRE:_BPRE + 1]
    g1   = vec_ref[0:mid, _G1:_G1 + 1]
    be1  = vec_ref[0:mid, _BE1:_BE1 + 1]
    b1   = vec_ref[0:mid, _B1:_B1 + 1]
    g2   = vec_ref[0:mid, _G2:_G2 + 1]
    be2  = vec_ref[0:mid, _BE2:_BE2 + 1]
    bg   = vec_ref[0:mid, _BG:_BG + 1]
    b2s  = vec_ref[0:c_out, _B2S:_B2S + 1]

    w1 = w1_ref[...]
    wgT = wgT_ref[...]
    adjT = adjT_ref[...]
    w2s = w2s_ref[...]

    for bb in range(bpg):                     # static unroll (bpg == 1 by default)
        x_raw = x_ref[bb]                     # (c_in, v), I/O dtype
        x = x_raw.astype(f32)

        # pre_norm -> relu -> lin1   (bf16 MXU operands, f32 accumulation)
        y = gn_relu(x, gpre, bpre, groups_pre)
        y = jnp.dot(w1, y.astype(bf16), preferred_element_type=f32) + b1

        # norm1 -> relu -> GraphConvolution   (conv^T = Wg^T @ y @ A^T)
        y = gn_relu(y, g1, be1, groups_mid)
        support = jnp.dot(wgT, y.astype(bf16), preferred_element_type=f32)
        # TODO(synk): for large V, hold adjT stationary via pltpu.matmul_push_rhs
        # across samples; at these channel counts the body is VALU/vst bound.
        conv = jnp.dot(support.astype(bf16), adjT, preferred_element_type=f32) + bg

        # norm2 -> relu -> fused lin2 (+ skip_conv);  cast BEFORE the concat
        y = gn_relu(conv, g2, be2, groups_mid)
        if has_skip:
            yx = jnp.concatenate([y.astype(bf16), x_raw.astype(bf16)], axis=0)
            out = jnp.dot(w2s, yx, preferred_element_type=f32) + b2s
        else:
            out = jnp.dot(w2s, y.astype(bf16), preferred_element_type=f32) + b2s + x
        out_ref[bb] = out.astype(out_ref.dtype)


def graph_res_block(x, params, adj, *, in_channels, out_channels,
                    batch_per_step=1, out_dtype=None):
    b, c_in, v = x.shape
    assert c_in == in_channels
    mid = out_channels // 2
    groups_pre = in_channels // 8
    groups_mid = mid // 8
    assert in_channels % 8 == 0 and mid % 8 == 0, "GroupNorm(C//8, C) needs C % 8 == 0"
    assert b % batch_per_step == 0
    has_skip = in_channels != out_channels
    if out_dtype is None:
        out_dtype = x.dtype

    f32, bf16 = jnp.float32, jnp.bfloat16

    # ---- one-time host-side weight prep (tiny; NO activation transposes) ----
    w1   = params["w1"].astype(bf16)                             # (mid, c_in)
    wgT  = jnp.transpose(params["wg"]).astype(bf16)              # (mid, mid)
    adjT = jnp.transpose(adj).astype(bf16)                       # (V, V)
    if has_skip:
        w2s = jnp.concatenate([params["w2"], params["ws"]], axis=1).astype(bf16)
        b2s = params["b2"] + params["bs"]
    else:
        w2s = params["w2"].astype(bf16)
        b2s = params["b2"]

    c_max = max(c_in, mid, out_channels)

    def col(vv):
        vv = jnp.ravel(vv).astype(f32)
        return jnp.pad(vv, (0, c_max - vv.shape[0]))

    vec = jnp.stack(
        [col(params["gpre"]), col(params["bpre"]),
         col(params["g1"]), col(params["be1"]), col(params["b1"]),
         col(params["g2"]), col(params["be2"]), col(params["bg"]),
         col(b2s)], axis=1)                                      # (c_max, 9) f32

    kernel = functools.partial(
        _graph_res_block_kernel,
        c_in=c_in, mid=mid, c_out=out_channels,
        groups_pre=groups_pre, groups_mid=groups_mid,
        bpg=batch_per_step, v=v, has_skip=has_skip)

    def const_spec(a):
        # Grid-invariant operand: constant index map + single buffer (no point
        # double-buffering something that is fetched once).
        nd = a.ndim
        return pl.BlockSpec(a.shape, lambda i, _nd=nd: (0,) * _nd,
                            pipeline_mode=pl.Buffered(1))

    # Explicit VMEM budget: double-buffered x/out blocks + single-buffered
    # weights/adjacency/vec + headroom for live f32 temps in the body.  Raised
    # above the 16/32 MiB scoped defaults, capped well under v7x's 64 MiB.
    act_lanes = batch_per_step * v
    est = (2 * c_in * act_lanes * jnp.dtype(x.dtype).itemsize
           + 2 * out_channels * act_lanes * jnp.dtype(out_dtype).itemsize
           + 2 * (w1.size + wgT.size + adjT.size + w2s.size)
           + 4 * vec.size
           + 8 * c_max * act_lanes * 4)
    vmem_limit = int(min(max(2 * est, 32 * 1024 * 1024), 48 * 1024 * 1024))

    return pl.pallas_call(
        kernel,
        out_shape=jax.ShapeDtypeStruct((b, out_channels, v), out_dtype),
        grid=(b // batch_per_step,),
        in_specs=[pl.BlockSpec((batch_per_step, c_in, v), lambda i: (i, 0, 0)),
                  const_spec(w1), const_spec(wgT), const_spec(adjT),
                  const_spec(w2s), const_spec(vec)],
        out_specs=pl.BlockSpec((batch_per_step, out_channels, v),
                               lambda i: (i, 0, 0)),
        compiler_params=pltpu.CompilerParams(
            dimension_semantics=("parallel",),
            vmem_limit_bytes=vmem_limit),
    )(x, w1, wgT, adjT, w2s, vec)


def reference(x, params, adj, *, in_channels, out_channels):
    """Pure-JAX mirror of the PyTorch forward (for verification)."""
    mid = out_channels // 2
    gp, gm = in_channels // 8, mid // 8
    hi = jax.lax.Precision.HIGHEST

    def gn(t, gamma, beta, g):
        bb, c, vv = t.shape
        tg = t.reshape(bb, g, c // g, vv)
        m = tg.mean(axis=(2, 3), keepdims=True)
        var = ((tg - m) ** 2).mean(axis=(2, 3), keepdims=True)
        tn = ((tg - m) / jnp.sqrt(var + EPS)).reshape(bb, c, vv)
        return tn * gamma.reshape(1, c, 1) + beta.reshape(1, c, 1)

    y = jax.nn.relu(gn(x, params["gpre"], params["bpre"], gp))
    y = jnp.einsum("oc,bcv->bov", params["w1"], y, precision=hi) \
        + params["b1"].reshape(1, -1, 1)
    y = jax.nn.relu(gn(y, params["g1"], params["be1"], gm))
    yt = jnp.swapaxes(y, 1, 2)                                      # (B, V, C)
    support = jnp.einsum("bvc,cd->bvd", yt, params["wg"], precision=hi)
    conv = jnp.einsum("uv,bvd->bud", adj, support, precision=hi) \
        + params["bg"].reshape(1, 1, -1)
    y = jnp.swapaxes(conv, 1, 2)
    y = jax.nn.relu(gn(y, params["g2"], params["be2"], gm))
    y = jnp.einsum("oc,bcv->bov", params["w2"], y, precision=hi) \
        + params["b2"].reshape(1, -1, 1)
    if in_channels != out_channels:
        skip = jnp.einsum("oc,bcv->bov", params["ws"], x, precision=hi) \
            + params["bs"].reshape(1, -1, 1)
    else:
        skip = x
    return skip + y


def _make_case(key, b, c_in, c_out, v):
    mid = c_out // 2
    kx, ka, *kp = jax.random.split(key, 12)
    x = jax.random.normal(kx, (b, c_in, v), jnp.float32)

    # Deterministic dense adjacency (row-normalized). The PyTorch module may use
    # a sparse adjmat; forward semantics of the dense matmul are identical.
    a_raw = jax.random.uniform(ka, (v, v), jnp.float32)
    adj = a_raw / jnp.sum(a_raw, axis=1, keepdims=True)

    def u(k, shape, stdv):
        return jax.random.uniform(k, shape, jnp.float32, -stdv, stdv)

    # Init exactly as the PyTorch module's reset_parameters() prescribe.
    s1 = 1.0 / (c_in * mid)              # GraphLinear lin1
    sg = 6.0 / math.sqrt(mid + mid)      # GraphConvolution
    s2 = 1.0 / (mid * c_out)             # GraphLinear lin2
    params = {
        "w1": u(kp[0], (mid, c_in), s1),   "b1": u(kp[1], (mid,), s1),
        "wg": u(kp[2], (mid, mid), sg),    "bg": u(kp[3], (mid,), sg),
        "w2": u(kp[4], (c_out, mid), s2),  "b2": u(kp[5], (c_out,), s2),
        # nn.GroupNorm affine defaults: gamma=1, beta=0
        "gpre": jnp.ones((c_in,), jnp.float32),
        "bpre": jnp.zeros((c_in,), jnp.float32),
        "g1": jnp.ones((mid,), jnp.float32),
        "be1": jnp.zeros((mid,), jnp.float32),
        "g2": jnp.ones((mid,), jnp.float32),
        "be2": jnp.zeros((mid,), jnp.float32),
    }
    if c_in != c_out:
        ss = 1.0 / (c_in * c_out)        # GraphLinear skip_conv
        params["ws"] = u(kp[6], (c_out, c_in), ss)
        params["bs"] = u(kp[7], (c_out,), ss)
    return x, params, adj


if __name__ == "__main__":
    key = jax.random.PRNGKey(0)
    k1, k2 = jax.random.split(key)

    # Case 1: in_channels != out_channels (skip_conv path).
    B, C_IN, C_OUT, V = 2, 32, 64, 128
    x, params, adj = _make_case(k1, B, C_IN, C_OUT, V)
    out = jax.block_until_ready(
        graph_res_block(x, params, adj, in_channels=C_IN, out_channels=C_OUT))
    ref = jax.block_until_ready(
        reference(x, params, adj, in_channels=C_IN, out_channels=C_OUT))
    assert out.shape == (B, C_OUT, V), out.shape
    err1 = float(jnp.max(jnp.abs(out - ref)))
    assert jnp.allclose(out, ref, atol=1e-3, rtol=1e-3), err1

    # Case 2: in_channels == out_channels (identity-skip path).
    B, C_IN, C_OUT, V = 2, 32, 32, 128
    x, params, adj = _make_case(k2, B, C_IN, C_OUT, V)
    out = jax.block_until_ready(
        graph_res_block(x, params, adj, in_channels=C_IN, out_channels=C_OUT))
    ref = jax.block_until_ready(
        reference(x, params, adj, in_channels=C_IN, out_channels=C_OUT))
    assert out.shape == (B, C_OUT, V), out.shape
    err2 = float(jnp.max(jnp.abs(out - ref)))
    assert jnp.allclose(out, ref, atol=1e-3, rtol=1e-3), err2

    print("KERNEL_OK")
</pallas_src>

<mosaic_0001>
module attributes {stable_mosaic.version = 11 : i64} {
  func.func @_graph_res_block_kernel(%arg0: i32, %arg1: memref<1x32x128xf32, #tpu.memory_space<vmem>>, %arg2: memref<32x32xbf16, #tpu.memory_space<vmem>>, %arg3: memref<32x32xbf16, #tpu.memory_space<vmem>>, %arg4: memref<128x128xbf16, #tpu.memory_space<vmem>>, %arg5: memref<64x64xbf16, #tpu.memory_space<vmem>>, %arg6: memref<64x9xf32, #tpu.memory_space<vmem>>, %arg7: memref<1x64x128xf32, #tpu.memory_space<vmem>>) attributes {dimension_semantics = [#tpu.dimension_semantics<parallel>], iteration_bounds = array<i64: 2>, scalar_prefetch = 0 : i64, scratch_operands = 0 : i64, tpu.core_type = #tpu.core_type<tc>, window_params = [{transform_indices = @transform_0, window_bounds = array<i64: 1, 32, 128>}, {pipeline_mode = #tpu.pipeline_mode<synchronous>, transform_indices = @transform_1, window_bounds = array<i64: 32, 32>}, {pipeline_mode = #tpu.pipeline_mode<synchronous>, transform_indices = @transform_2, window_bounds = array<i64: 32, 32>}, {pipeline_mode = #tpu.pipeline_mode<synchronous>, transform_indices = @transform_3, window_bounds = array<i64: 128, 128>}, {pipeline_mode = #tpu.pipeline_mode<synchronous>, transform_indices = @transform_4, window_bounds = array<i64: 64, 64>}, {pipeline_mode = #tpu.pipeline_mode<synchronous>, transform_indices = @transform_5, window_bounds = array<i64: 64, 9>}, {transform_indices = @transform_6, window_bounds = array<i64: 1, 64, 128>}]} {
    %c0 = arith.constant 0 : index
    %c0_0 = arith.constant 0 : index
    %0 = vector.load %arg6[%c0, %c0_0] : memref<64x9xf32, #tpu.memory_space<vmem>>, vector<32x1xf32>
    %c0_1 = arith.constant 0 : index
    %c1 = arith.constant 1 : index
    %1 = vector.load %arg6[%c0_1, %c1] : memref<64x9xf32, #tpu.memory_space<vmem>>, vector<32x1xf32>
    %c0_2 = arith.constant 0 : index
    %c2 = arith.constant 2 : index
    %2 = vector.load %arg6[%c0_2, %c2] : memref<64x9xf32, #tpu.memory_space<vmem>>, vector<32x1xf32>
    %c0_3 = arith.constant 0 : index
    %c3 = arith.constant 3 : index
    %3 = vector.load %arg6[%c0_3, %c3] : memref<64x9xf32, #tpu.memory_space<vmem>>, vector<32x1xf32>
    %c0_4 = arith.constant 0 : index
    %c4 = arith.constant 4 : index
    %4 = vector.load %arg6[%c0_4, %c4] : memref<64x9xf32, #tpu.memory_space<vmem>>, vector<32x1xf32>
    %c0_5 = arith.constant 0 : index
    %c5 = arith.constant 5 : index
    %5 = vector.load %arg6[%c0_5, %c5] : memref<64x9xf32, #tpu.memory_space<vmem>>, vector<32x1xf32>
    %c0_6 = arith.constant 0 : index
    %c6 = arith.constant 6 : index
    %6 = vector.load %arg6[%c0_6, %c6] : memref<64x9xf32, #tpu.memory_space<vmem>>, vector<32x1xf32>
    %c0_7 = arith.constant 0 : index
    %c7 = arith.constant 7 : index
    %7 = vector.load %arg6[%c0_7, %c7] : memref<64x9xf32, #tpu.memory_space<vmem>>, vector<32x1xf32>
    %c0_8 = arith.constant 0 : index
    %c8 = arith.constant 8 : index
    %8 = vector.load %arg6[%c0_8, %c8] : memref<64x9xf32, #tpu.memory_space<vmem>>, vector<64x1xf32>
    %c0_9 = arith.constant 0 : index
    %c0_10 = arith.constant 0 : index
    %9 = vector.load %arg2[%c0_9, %c0_10] : memref<32x32xbf16, #tpu.memory_space<vmem>>, vector<32x32xbf16>
    %c0_11 = arith.constant 0 : index
    %c0_12 = arith.constant 0 : index
    %10 = vector.load %arg3[%c0_11, %c0_12] : memref<32x32xbf16, #tpu.memory_space<vmem>>, vector<32x32xbf16>
    %c0_13 = arith.constant 0 : index
    %c0_14 = arith.constant 0 : index
    %11 = vector.load %arg4[%c0_13, %c0_14] : memref<128x128xbf16, #tpu.memory_space<vmem>>, vector<128x128xbf16>
    %c0_15 = arith.constant 0 : index
    %c0_16 = arith.constant 0 : index
    %12 = vector.load %arg5[%c0_15, %c0_16] : memref<64x64xbf16, #tpu.memory_space<vmem>>, vector<64x64xbf16>
    %c0_17 = arith.constant 0 : index
    %c0_18 = arith.constant 0 : index
    %c0_19 = arith.constant 0 : index
    %13 = vector.load %arg1[%c0_17, %c0_18, %c0_19] : memref<1x32x128xf32, #tpu.memory_space<vmem>>, vector<1x32x128xf32>
    %14 = vector.shape_cast %13 : vector<1x32x128xf32> to vector<32x128xf32>
    %15 = vector.shape_cast %14 : vector<32x128xf32> to vector<4x8x128xf32>
    %cst = arith.constant dense<0.000000e+00> : vector<4x8xf32>
    %16 = vector.multi_reduction <add>, %15, %cst [2] : vector<4x8x128xf32> to vector<4x8xf32>
    %17 = vector.shape_cast %16 : vector<4x8xf32> to vector<4x8x1xf32>
    %cst_20 = arith.constant dense<0.000000e+00> : vector<4x1xf32>
    %18 = vector.multi_reduction <add>, %17, %cst_20 [1] : vector<4x8x1xf32> to vector<4x1xf32>
    %19 = vector.shape_cast %18 : vector<4x1xf32> to vector<4x1x1xf32>
    %20 = arith.mulf %15, %15 : vector<4x8x128xf32>
    %cst_21 = arith.constant dense<0.000000e+00> : vector<4x8xf32>
    %21 = vector.multi_reduction <add>, %20, %cst_21 [2] : vector<4x8x128xf32> to vector<4x8xf32>
    %22 = vector.shape_cast %21 : vector<4x8xf32> to vector<4x8x1xf32>
    %cst_22 = arith.constant dense<0.000000e+00> : vector<4x1xf32>
    %23 = vector.multi_reduction <add>, %22, %cst_22 [1] : vector<4x8x1xf32> to vector<4x1xf32>
    %24 = vector.shape_cast %23 : vector<4x1xf32> to vector<4x1x1xf32>
    %cst_23 = arith.constant 1.024000e+03 : f32
    %25 = vector.broadcast %cst_23 : f32 to vector<4x1x1xf32>
    %26 = arith.divf %19, %25 : vector<4x1x1xf32>
    %cst_24 = arith.constant 1.024000e+03 : f32
    %27 = vector.broadcast %cst_24 : f32 to vector<4x1x1xf32>
    %28 = arith.divf %24, %27 : vector<4x1x1xf32>
    %29 = arith.mulf %26, %26 : vector<4x1x1xf32>
    %30 = arith.subf %28, %29 : vector<4x1x1xf32>
    %cst_25 = arith.constant 0.000000e+00 : f32
    %31 = vector.broadcast %cst_25 : f32 to vector<4x1x1xf32>
    %32 = arith.maximumf %30, %31 : vector<4x1x1xf32>
    %33 = vector.broadcast %26 : vector<4x1x1xf32> to vector<4x8x128xf32>
    %34 = arith.subf %15, %33 : vector<4x8x128xf32>
    %cst_26 = arith.constant 9.99999974E-6 : f32
    %35 = vector.broadcast %cst_26 : f32 to vector<4x1x1xf32>
    %36 = arith.addf %32, %35 : vector<4x1x1xf32>
    %37 = math.rsqrt %36 : vector<4x1x1xf32>
    %38 = vector.broadcast %37 : vector<4x1x1xf32> to vector<4x8x128xf32>
    %39 = arith.mulf %34, %38 : vector<4x8x128xf32>
    %40 = vector.shape_cast %39 : vector<4x8x128xf32> to vector<32x128xf32>
    %41 = vector.broadcast %0 : vector<32x1xf32> to vector<32x128xf32>
    %42 = arith.mulf %40, %41 : vector<32x128xf32>
    %43 = vector.broadcast %1 : vector<32x1xf32> to vector<32x128xf32>
    %44 = arith.addf %42, %43 : vector<32x128xf32>
    %cst_27 = arith.constant 0.000000e+00 : f32
    %45 = vector.broadcast %cst_27 : f32 to vector<32x128xf32>
    %46 = arith.maximumf %44, %45 : vector<32x128xf32>
    %47 = arith.truncf %46 : vector<32x128xf32> to vector<32x128xbf16>
    %cst_28 = arith.constant dense<0.000000e+00> : vector<32x128xf32>
    %48 = tpu.matmul %9, %47, %cst_28 {dimension_numbers = #tpu.dot_dimension_numbers<[1], [0], [0], [1], [0, 0, 1, 1], [], []>} : vector<32x32xbf16>, vector<32x128xbf16>, vector<32x128xf32> -> vector<32x128xf32>
    %49 = vector.broadcast %4 : vector<32x1xf32> to vector<32x128xf32>
    %50 = arith.addf %48, %49 : vector<32x128xf32>
    %51 = vector.shape_cast %50 : vector<32x128xf32> to vector<4x8x128xf32>
    %cst_29 = arith.constant dense<0.000000e+00> : vector<4x8xf32>
    %52 = vector.multi_reduction <add>, %51, %cst_29 [2] : vector<4x8x128xf32> to vector<4x8xf32>
    %53 = vector.shape_cast %52 : vector<4x8xf32> to vector<4x8x1xf32>
    %cst_30 = arith.constant dense<0.000000e+00> : vector<4x1xf32>
    %54 = vector.multi_reduction <add>, %53, %cst_30 [1] : vector<4x8x1xf32> to vector<4x1xf32>
    %55 = vector.shape_cast %54 : vector<4x1xf32> to vector<4x1x1xf32>
    %56 = arith.mulf %51, %51 : vector<4x8x128xf32>
    %cst_31 = arith.constant dense<0.000000e+00> : vector<4x8xf32>
    %57 = vector.multi_reduction <add>, %56, %cst_31 [2] : vector<4x8x128xf32> to vector<4x8xf32>
    %58 = vector.shape_cast %57 : vector<4x8xf32> to vector<4x8x1xf32>
    %cst_32 = arith.constant dense<0.000000e+00> : vector<4x1xf32>
    %59 = vector.multi_reduction <add>, %58, %cst_32 [1] : vector<4x8x1xf32> to vector<4x1xf32>
    %60 = vector.shape_cast %59 : vector<4x1xf32> to vector<4x1x1xf32>
    %cst_33 = arith.constant 1.024000e+03 : f32
    %61 = vector.broadcast %cst_33 : f32 to vector<4x1x1xf32>
    %62 = arith.divf %55, %61 : vector<4x1x1xf32>
    %cst_34 = arith.constant 1.024000e+03 : f32
    %63 = vector.broadcast %cst_34 : f32 to vector<4x1x1xf32>
    %64 = arith.divf %60, %63 : vector<4x1x1xf32>
    %65 = arith.mulf %62, %62 : vector<4x1x1xf32>
    %66 = arith.subf %64, %65 : vector<4x1x1xf32>
    %cst_35 = arith.constant 0.000000e+00 : f32
    %67 = vector.broadcast %cst_35 : f32 to vector<4x1x1xf32>
    %68 = arith.maximumf %66, %67 : vector<4x1x1xf32>
    %69 = vector.broadcast %62 : vector<4x1x1xf32> to vector<4x8x128xf32>
    %70 = arith.subf %51, %69 : vector<4x8x128xf32>
    %cst_36 = arith.constant 9.99999974E-6 : f32
    %71 = vector.broadcast %cst_36 : f32 to vector<4x1x1xf32>
    %72 = arith.addf %68, %71 : vector<4x1x1xf32>
    %73 = math.rsqrt %72 : vector<4x1x1xf32>
    %74 = vector.broadcast %73 : vector<4x1x1xf32> to vector<4x8x128xf32>
    %75 = arith.mulf %70, %74 : vector<4x8x128xf32>
    %76 = vector.shape_cast %75 : vector<4x8x128xf32> to vector<32x128xf32>
    %77 = vector.broadcast %2 : vector<32x1xf32> to vector<32x128xf32>
    %78 = arith.mulf %76, %77 : vector<32x128xf32>
    %79 = vector.broadcast %3 : vector<32x1xf32> to vector<32x128xf32>
    %80 = arith.addf %78, %79 : vector<32x128xf32>
    %cst_37 = arith.constant 0.000000e+00 : f32
    %81 = vector.broadcast %cst_37 : f32 to vector<32x128xf32>
    %82 = arith.maximumf %80, %81 : vector<32x128xf32>
    %83 = arith.truncf %82 : vector<32x128xf32> to vector<32x128xbf16>
    %cst_38 = arith.constant dense<0.000000e+00> : vector<32x128xf32>
    %84 = tpu.matmul %10, %83, %cst_38 {dimension_numbers = #tpu.dot_dimension_numbers<[1], [0], [0], [1], [0, 0, 1, 1], [], []>} : vector<32x32xbf16>, vector<32x128xbf16>, vector<32x128xf32> -> vector<32x128xf32>
    %85 = arith.truncf %84 : vector<32x128xf32> to vector<32x128xbf16>
    %cst_39 = arith.constant dense<0.000000e+00> : vector<32x128xf32>
    %86 = tpu.matmul %85, %11, %cst_39 {dimension_numbers = #tpu.dot_dimension_numbers<[1], [0], [0], [1], [0, 0, 1, 1], [], []>} : vector<32x128xbf16>, vector<128x128xbf16>, vector<32x128xf32> -> vector<32x128xf32>
    %87 = vector.broadcast %7 : vector<32x1xf32> to vector<32x128xf32>
    %88 = arith.addf %86, %87 : vector<32x128xf32>
    %89 = vector.shape_cast %88 : vector<32x128xf32> to vector<4x8x128xf32>
    %cst_40 = arith.constant dense<0.000000e+00> : vector<4x8xf32>
    %90 = vector.multi_reduction <add>, %89, %cst_40 [2] : vector<4x8x128xf32> to vector<4x8xf32>
    %91 = vector.shape_cast %90 : vector<4x8xf32> to vector<4x8x1xf32>
    %cst_41 = arith.constant dense<0.000000e+00> : vector<4x1xf32>
    %92 = vector.multi_reduction <add>, %91, %cst_41 [1] : vector<4x8x1xf32> to vector<4x1xf32>
    %93 = vector.shape_cast %92 : vector<4x1xf32> to vector<4x1x1xf32>
    %94 = arith.mulf %89, %89 : vector<4x8x128xf32>
    %cst_42 = arith.constant dense<0.000000e+00> : vector<4x8xf32>
    %95 = vector.multi_reduction <add>, %94, %cst_42 [2] : vector<4x8x128xf32> to vector<4x8xf32>
    %96 = vector.shape_cast %95 : vector<4x8xf32> to vector<4x8x1xf32>
    %cst_43 = arith.constant dense<0.000000e+00> : vector<4x1xf32>
    %97 = vector.multi_reduction <add>, %96, %cst_43 [1] : vector<4x8x1xf32> to vector<4x1xf32>
    %98 = vector.shape_cast %97 : vector<4x1xf32> to vector<4x1x1xf32>
    %cst_44 = arith.constant 1.024000e+03 : f32
    %99 = vector.broadcast %cst_44 : f32 to vector<4x1x1xf32>
    %100 = arith.divf %93, %99 : vector<4x1x1xf32>
    %cst_45 = arith.constant 1.024000e+03 : f32
    %101 = vector.broadcast %cst_45 : f32 to vector<4x1x1xf32>
    %102 = arith.divf %98, %101 : vector<4x1x1xf32>
    %103 = arith.mulf %100, %100 : vector<4x1x1xf32>
    %104 = arith.subf %102, %103 : vector<4x1x1xf32>
    %cst_46 = arith.constant 0.000000e+00 : f32
    %105 = vector.broadcast %cst_46 : f32 to vector<4x1x1xf32>
    %106 = arith.maximumf %104, %105 : vector<4x1x1xf32>
    %107 = vector.broadcast %100 : vector<4x1x1xf32> to vector<4x8x128xf32>
    %108 = arith.subf %89, %107 : vector<4x8x128xf32>
    %cst_47 = arith.constant 9.99999974E-6 : f32
    %109 = vector.broadcast %cst_47 : f32 to vector<4x1x1xf32>
    %110 = arith.addf %106, %109 : vector<4x1x1xf32>
    %111 = math.rsqrt %110 : vector<4x1x1xf32>
    %112 = vector.broadcast %111 : vector<4x1x1xf32> to vector<4x8x128xf32>
    %113 = arith.mulf %108, %112 : vector<4x8x128xf32>
    %114 = vector.shape_cast %113 : vector<4x8x128xf32> to vector<32x128xf32>
    %115 = vector.broadcast %5 : vector<32x1xf32> to vector<32x128xf32>
    %116 = arith.mulf %114, %115 : vector<32x128xf32>
    %117 = vector.broadcast %6 : vector<32x1xf32> to vector<32x128xf32>
    %118 = arith.addf %116, %117 : vector<32x128xf32>
    %cst_48 = arith.constant 0.000000e+00 : f32
    %119 = vector.broadcast %cst_48 : f32 to vector<32x128xf32>
    %120 = arith.maximumf %118, %119 : vector<32x128xf32>
    %121 = arith.truncf %120 : vector<32x128xf32> to vector<32x128xbf16>
    %122 = arith.truncf %14 : vector<32x128xf32> to vector<32x128xbf16>
    %123 = tpu.concatenate %121, %122 in 0 : vector<32x128xbf16>, vector<32x128xbf16> -> vector<64x128xbf16>
    %cst_49 = arith.constant dense<0.000000e+00> : vector<64x128xf32>
    %124 = tpu.matmul %12, %123, %cst_49 {dimension_numbers = #tpu.dot_dimension_numbers<[1], [0], [0], [1], [0, 0, 1, 1], [], []>} : vector<64x64xbf16>, vector<64x128xbf16>, vector<64x128xf32> -> vector<64x128xf32>
    %125 = vector.broadcast %8 : vector<64x1xf32> to vector<64x128xf32>
    %126 = arith.addf %124, %125 : vector<64x128xf32>
    %c0_50 = arith.constant 0 : index
    %c0_51 = arith.constant 0 : index
    %c0_52 = arith.constant 0 : index
    %127 = vector.load %arg7[%c0_50, %c0_51, %c0_52] : memref<1x64x128xf32, #tpu.memory_space<vmem>>, vector<1x64x128xf32>
    %128 = vector.shape_cast %127 : vector<1x64x128xf32> to vector<64x128xf32>
    %129 = vector.shape_cast %126 : vector<64x128xf32> to vector<1x64x128xf32>
    tpu.vector_store %arg7[%c0_50, %c0_51, %c0_52], %129 {strides = array<i32>} : memref<1x64x128xf32, #tpu.memory_space<vmem>>, vector<1x64x128xf32>,
    return
  }
  func.func @transform_0(%arg0: i32) -> (i32, i32, i32) {
    %c0_i32 = arith.constant 0 : i32
    %c0_i32_0 = arith.constant 0 : i32
    %c0_i32_1 = arith.constant 0 : i32
    return %arg0, %c0_i32, %c0_i32_0 : i32, i32, i32
  }
  func.func @transform_1(%arg0: i32) -> (i32, i32) {
    %c0_i32 = arith.constant 0 : i32
    %c0_i32_0 = arith.constant 0 : i32
    %c0_i32_1 = arith.constant 0 : i32
    return %c0_i32, %c0_i32_0 : i32, i32
  }
  func.func @transform_2(%arg0: i32) -> (i32, i32) {
    %c0_i32 = arith.constant 0 : i32
    %c0_i32_0 = arith.constant 0 : i32
    %c0_i32_1 = arith.constant 0 : i32
    return %c0_i32, %c0_i32_0 : i32, i32
  }
  func.func @transform_3(%arg0: i32) -> (i32, i32) {
    %c0_i32 = arith.constant 0 : i32
    %c0_i32_0 = arith.constant 0 : i32
    %c0_i32_1 = arith.constant 0 : i32
    return %c0_i32, %c0_i32_0 : i32, i32
  }
  func.func @transform_4(%arg0: i32) -> (i32, i32) {
    %c0_i32 = arith.constant 0 : i32
    %c0_i32_0 = arith.constant 0 : i32
    %c0_i32_1 = arith.constant 0 : i32
    return %c0_i32, %c0_i32_0 : i32, i32
  }
  func.func @transform_5(%arg0: i32) -> (i32, i32) {
    %c0_i32 = arith.constant 0 : i32
    %c0_i32_0 = arith.constant 0 : i32
    %c0_i32_1 = arith.constant 0 : i32
    return %c0_i32, %c0_i32_0 : i32, i32
  }
  func.func @transform_6(%arg0: i32) -> (i32, i32, i32) {
    %c0_i32 = arith.constant 0 : i32
    %c0_i32_0 = arith.constant 0 : i32
    %c0_i32_1 = arith.constant 0 : i32
    return %arg0, %c0_i32, %c0_i32_0 : i32, i32, i32
  }
}

</mosaic_0001>

<llo_original>
// kernel: tpu_custom_call.1
$region0: #{tpu_custom_call.1}
  #allocation0 [shape = 'u32[]', space=smem, size = 0x4, offset = 0x4, fixed_abs, tag = 'smem constant byte address 0x4 - core index']
  #allocation1 [shape = 'u32[144,128]{1,0:T(1,128)}', space=vmem, size = 0x12000, scoped, tag = 'internal scratch']
  %s0 = inlined_call_operand.vmem [shape: f32[2,32,128], index: 0, kind: input, shape index: {}]
  %s1 = inlined_call_operand.vmem [shape: bf16[32,32], index: 1, kind: input, shape index: {}]
  %s2 = inlined_call_operand.hbm [shape: bf16[32,32], index: 2, kind: input, shape index: {}]
  %s3 = inlined_call_operand.hbm [shape: bf16[128,128], index: 3, kind: input, shape index: {}]
  %s4 = inlined_call_operand.hbm [shape: bf16[64,64], index: 4, kind: input, shape index: {}]
  %s5 = inlined_call_operand.vmem [shape: f32[64,9], index: 5, kind: input, shape index: {}]
  %s6 = inlined_call_operand.hbm [shape: f32[2,64,128], index: 6, kind: output, shape index: {}]
  %s7 = sld [smem:[#allocation0]]
  $region69: #{tpu_custom_call.1} parent=0
    _
  %s9 = ssub.s32 1, %s7
  %s10 = scalar_select 0, %s9, %s7
  $region1: #{tpu_custom_call.1} parent=0
    #allocation2 [shape = 'u8[8192]{0}', space=vmem, size = 0x2000, scoped, tag = 'input window, operand 2, single buffered']
    #allocation3 [shape = 's32[2]{0}', space=sflag, size = 0x8, scoped, tag = 'scoped memory for tpu_custom_call.1']
    #allocation4 [shape = 's32[2]{0}', space=sflag, size = 0x8, scoped, tag = 'scoped memory for tpu_custom_call.1']
    #allocation5 [shape = 'u8[32768]{0}', space=vmem, size = 0x8000, scoped, tag = 'input window, operand 3, single buffered']
    #allocation6 [shape = 's32[1]{0}', space=sflag, size = 0x4, scoped, tag = 'scoped memory for tpu_custom_call.1']
    #allocation7 [shape = 'u8[16384]{0}', space=vmem, size = 0x4000, scoped, tag = 'input window, operand 4, single buffered']
    #allocation8 [shape = 'u8[65536]{0}', space=vmem, size = 0x10000, scoped, tag = 'output window, operand 0']
    %11 = vsyncpa [#allocation3], 0
    %12 = vsyncpa [#allocation6], 0
    %13 = vsyncpa [#allocation4], 0
    %s14 = scalar_lea.sflag [#allocation4], 1
    %15 = vsyncpa %s14, 0
    loop: start=0, step=1, limit=4
    $region2: #{tpu_custom_call.1} parent=1 // loop_pre_header
      _
    $region3: #{tpu_custom_call.1} parent=1 // loop_header
      %s17 = sphi 0, %s21
      %p18 = scmp.ge.s32.totalorder %s17, 4
      %s27 = sphi 0, %s29
      %s30 = sphi 0, %s27
      %s31 = sphi 0, %s30
      %s47 = sphi 0, %s31
      %s51 = sphi 0, %s51
      %s53 = sphi 0, %s51
      %s54 = sphi 0, %s53
      %s68 = sphi 0, %s54
      %s72 = sphi 0, %s72
      %s74 = sphi 0, %s72
      %s75 = sphi 0, %s74
      %s89 = sphi 0, %s75
      %s93 = sphi 0, %s93
      %s95 = sphi 0, %s93
      %s96 = sphi 0, %s95
      %s110 = sphi 0, %s96
      %s114 = sphi 0, %s114
      %s116 = sphi 0, %s114
      %s117 = sphi 0, %s116
      %s131 = sphi 0, %s117
      %s135 = sphi 0, %s135
      %s137 = sphi 0, %s135
      %s138 = sphi 0, %s137
      %s152 = sphi 0, %s138
      %s158 = sphi 0, %s160
      %s161 = sphi 0, %s158
      %s162 = sphi 0, %s161
      %s178 = sphi 0, %s162
    $region4: #{tpu_custom_call.1} parent=1 // loop_header_branch
      %20 = sbr.rel (%p18) target = $region8
    $region5: #{tpu_custom_call.1} parent=1 // loop_body
      %s22 = ssub.s32 %s17, 1
      %s23 = ssub.s32 %s17, 2
      %s24 = sadd.s32 %s17, 1
      %s25 = ssub.s32 %s17, %s24
      %p26 = scmp.eq.s32.totalorder %s25, 0
      %s28 = sadd.s32 %s27, 1
      %s29 = scalar_select %p26, %s27, %s28
      %p32 = pneg %p26
      %p33 = scmp.eq.s32.totalorder %s17, 1
      %p34 = por %p32, %p33
      %p35 = scmp.ne.s32.totalorder %s27, %s30
      %p36 = scmp.eq.s32.totalorder %s17, 0
      %p37 = por %p35, %p36
      %p38 = scmp.ne.s32.totalorder %s27, %s30
      %p39 = scmp.eq.s32.totalorder %s22, 1
      %p40 = por %p38, %p39
      %p41 = scmp.ne.s32.totalorder %s30, %s31
      %p42 = scmp.eq.s32.totalorder %s22, 0
      %p43 = por %p41, %p42
      %p44 = scmp.ne.s32.totalorder %s30, %s31
      %p45 = scmp.eq.s32.totalorder %s23, 1
      %p46 = por %p44, %p45
      %p48 = scmp.ne.s32.totalorder %s31, %s47
      %p49 = scmp.eq.s32.totalorder %s23, 0
      %p50 = por %p48, %p49
      %s52 = sadd.s32 %s51, 1
      %p55 = scmp.eq.s32.totalorder %s17, 1
      %p56 = scmp.ne.s32.totalorder %s51, %s53
      %p57 = scmp.eq.s32.totalorder %s17, 0
      %p58 = por %p56, %p57
      %p59 = scmp.ne.s32.totalorder %s51, %s53
      %p60 = scmp.eq.s32.totalorder %s22, 1
      %p61 = por %p59, %p60
      %p62 = scmp.ne.s32.totalorder %s53, %s54
      %p63 = scmp.eq.s32.totalorder %s22, 0
      %p64 = por %p62, %p63
      %p65 = scmp.ne.s32.totalorder %s53, %s54
      %p66 = scmp.eq.s32.totalorder %s23, 1
      %p67 = por %p65, %p66
      %p69 = scmp.ne.s32.totalorder %s54, %s68
      %p70 = scmp.eq.s32.totalorder %s23, 0
      %p71 = por %p69, %p70
      %s73 = sadd.s32 %s72, 1
      %p76 = scmp.eq.s32.totalorder %s17, 1
      %p77 = scmp.ne.s32.totalorder %s72, %s74
      %p78 = scmp.eq.s32.totalorder %s17, 0
      %p79 = por %p77, %p78
      %p80 = scmp.ne.s32.totalorder %s72, %s74
      %p81 = scmp.eq.s32.totalorder %s22, 1
      %p82 = por %p80, %p81
      %p83 = scmp.ne.s32.totalorder %s74, %s75
      %p84 = scmp.eq.s32.totalorder %s22, 0
      %p85 = por %p83, %p84
      %p86 = scmp.ne.s32.totalorder %s74, %s75
      %p87 = scmp.eq.s32.totalorder %s23, 1
      %p88 = por %p86, %p87
      %p90 = scmp.ne.s32.totalorder %s75, %s89
      %p91 = scmp.eq.s32.totalorder %s23, 0
      %p92 = por %p90, %p91
      %s94 = sadd.s32 %s93, 1
      %p97 = scmp.eq.s32.totalorder %s17, 1
      %p98 = scmp.ne.s32.totalorder %s93, %s95
      %p99 = scmp.eq.s32.totalorder %s17, 0
      %p100 = por %p98, %p99
      %p101 = scmp.ne.s32.totalorder %s93, %s95
      %p102 = scmp.eq.s32.totalorder %s22, 1
      %p103 = por %p101, %p102
      %p104 = scmp.ne.s32.totalorder %s95, %s96
      %p105 = scmp.eq.s32.totalorder %s22, 0
      %p106 = por %p104, %p105
      %p107 = scmp.ne.s32.totalorder %s95, %s96
      %p108 = scmp.eq.s32.totalorder %s23, 1
      %p109 = por %p107, %p108
      %p111 = scmp.ne.s32.totalorder %s96, %s110
      %p112 = scmp.eq.s32.totalorder %s23, 0
      %p113 = por %p111, %p112
      %s115 = sadd.s32 %s114, 1
      %p118 = scmp.eq.s32.totalorder %s17, 1
      %p119 = scmp.ne.s32.totalorder %s114, %s116
      %p120 = scmp.eq.s32.totalorder %s17, 0
      %p121 = por %p119, %p120
      %p122 = scmp.ne.s32.totalorder %s114, %s116
      %p123 = scmp.eq.s32.totalorder %s22, 1
      %p124 = por %p122, %p123
      %p125 = scmp.ne.s32.totalorder %s116, %s117
      %p126 = scmp.eq.s32.totalorder %s22, 0
      %p127 = por %p125, %p126
      %p128 = scmp.ne.s32.totalorder %s116, %s117
      %p129 = scmp.eq.s32.totalorder %s23, 1
      %p130 = por %p128, %p129
      %p132 = scmp.ne.s32.totalorder %s117, %s131
      %p133 = scmp.eq.s32.totalorder %s23, 0
      %p134 = por %p132, %p133
      %s136 = sadd.s32 %s135, 1
      %p139 = scmp.eq.s32.totalorder %s17, 1
      %p140 = scmp.ne.s32.totalorder %s135, %s137
      %p141 = scmp.eq.s32.totalorder %s17, 0
      %p142 = por %p140, %p141
      %p143 = scmp.ne.s32.totalorder %s135, %s137
      %p144 = scmp.eq.s32.totalorder %s22, 1
      %p145 = por %p143, %p144
      %p146 = scmp.ne.s32.totalorder %s137, %s138
      %p147 = scmp.eq.s32.totalorder %s22, 0
      %p148 = por %p146, %p147
      %p149 = scmp.ne.s32.totalorder %s137, %s138
      %p150 = scmp.eq.s32.totalorder %s23, 1
      %p151 = por %p149, %p150
      %p153 = scmp.ne.s32.totalorder %s138, %s152
      %p154 = scmp.eq.s32.totalorder %s23, 0
      %p155 = por %p153, %p154
      %s156 = ssub.s32 %s17, %s24
      %p157 = scmp.eq.s32.totalorder %s156, 0
      %s159 = sadd.s32 %s158, 1
      %s160 = scalar_select %p157, %s158, %s159
      %p163 = pneg %p157
      %p164 = scmp.eq.s32.totalorder %s17, 1
      %p165 = por %p163, %p164
      %p166 = scmp.ne.s32.totalorder %s158, %s161
      %p167 = scmp.eq.s32.totalorder %s17, 0
      %p168 = por %p166, %p167
      %p169 = scmp.ne.s32.totalorder %s158, %s161
      %p170 = scmp.eq.s32.totalorder %s22, 1
      %p171 = por %p169, %p170
      %p172 = scmp.ne.s32.totalorder %s161, %s162
      %p173 = scmp.eq.s32.totalorder %s22, 0
      %p174 = por %p172, %p173
      %p175 = scmp.ne.s32.totalorder %s161, %s162
      %p176 = scmp.eq.s32.totalorder %s23, 1
      %p177 = por %p175, %p176
      %p179 = scmp.ne.s32.totalorder %s162, %s178
      %p180 = scmp.eq.s32.totalorder %s23, 0
      %p181 = por %p179, %p180
      %p182 = scmp.le.s32.totalorder 1, %s17
      %p183 = scmp.lt.s32.totalorder %s17, 3
      %p184 = pnand %p182, %p183
      %p185 = pneg %p184
      // Predicated region
      $region9: #{tpu_custom_call.1} parent=5 // pred_check
        _
      $region10: #{tpu_custom_call.1} parent=5 // pred_check_branch
        %187 = sbr.rel (%p184) target = $region12
      $region11: #{tpu_custom_call.1} parent=5 // pred_region
        %s188 = ssub.s32 %s17, 1
        // Predicated region
        $region13: #{tpu_custom_call.1} parent=11 // pred_check
          %p189 = pneg %p64
        $region14: #{tpu_custom_call.1} parent=11 // pred_check_branch
          %191 = sbr.rel (%p189) target = $region16
        $region15: #{tpu_custom_call.1} parent=11 // pred_region
          _
        $region16: #{tpu_custom_call.1} parent=11 // pred_fallthru
          _
        // Predicated region
        $region17: #{tpu_custom_call.1} parent=11 // pred_check
          %p192 = pneg %p85
        $region18: #{tpu_custom_call.1} parent=11 // pred_check_branch
          %194 = sbr.rel (%p192) target = $region20
        $region19: #{tpu_custom_call.1} parent=11 // pred_region
          %s196 = ssub.s32 256, 256
          %197 = vsyncadd [#allocation3], %s196
          %s198 = sshll.u32 [#allocation2], 4
          %s199 = int_to_ptr.vmem [resolvable:$true] %s198
          %204 = dma.hbm_to_vmem [thread:$0]  %s2, 256, %s199, [#allocation3], 64, 64, 4
        $region20: #{tpu_custom_call.1} parent=11 // pred_fallthru
          _
        // Predicated region
        $region21: #{tpu_custom_call.1} parent=11 // pred_check
          %p205 = pneg %p106
        $region22: #{tpu_custom_call.1} parent=11 // pred_check_branch
          %207 = sbr.rel (%p205) target = $region24
        $region23: #{tpu_custom_call.1} parent=11 // pred_region
          %s209 = ssub.s32 1024, 1024
          %210 = vsyncadd [#allocation6], %s209
          %s211 = sshll.u32 [#allocation5], 4
          %s212 = int_to_ptr.vmem [resolvable:$true] %s211
          %217 = dma.hbm_to_vmem [thread:$0]  %s3, 1024, %s212, [#allocation6], 64, 64, 4
        $region24: #{tpu_custom_call.1} parent=11 // pred_fallthru
          _
        // Predicated region
        $region25: #{tpu_custom_call.1} parent=11 // pred_check
          %p218 = pneg %p127
        $region26: #{tpu_custom_call.1} parent=11 // pred_check_branch
          %220 = sbr.rel (%p218) target = $region28
        $region27: #{tpu_custom_call.1} parent=11 // pred_region
          %s222 = ssub.s32 512, 512
          %223 = vsyncadd [#allocation6], %s222
          %s224 = sshll.u32 [#allocation7], 4
          %s225 = int_to_ptr.vmem [resolvable:$true] %s224
          %230 = dma.hbm_to_vmem [thread:$0]  %s4, 512, %s225, [#allocation6], 64, 64, 4
        $region28: #{tpu_custom_call.1} parent=11 // pred_fallthru
          _
        // Predicated region
        $region29: #{tpu_custom_call.1} parent=11 // pred_check
          %p231 = pneg %p148
        $region30: #{tpu_custom_call.1} parent=11 // pred_check_branch
          %233 = sbr.rel (%p231) target = $region32
        $region31: #{tpu_custom_call.1} parent=11 // pred_region
          _
        $region32: #{tpu_custom_call.1} parent=11 // pred_fallthru
          _
      $region12: #{tpu_custom_call.1} parent=5 // pred_fallthru
        _
      %p234 = scmp.lt.s32.totalorder %s17, 2
      // Predicated region
      $region33: #{tpu_custom_call.1} parent=5 // pred_check
        %p235 = pneg %p234
      $region34: #{tpu_custom_call.1} parent=5 // pred_check_branch
        %237 = sbr.rel (%p235) target = $region36
      $region35: #{tpu_custom_call.1} parent=5 // pred_region
        // Predicated region
        $region37: #{tpu_custom_call.1} parent=35 // pred_check
          %p238 = pneg %p37
        $region38: #{tpu_custom_call.1} parent=35 // pred_check_branch
          %240 = sbr.rel (%p238) target = $region40
        $region39: #{tpu_custom_call.1} parent=35 // pred_region
          %p241 = scmp.lt.s32.totalorder %s17, 1
          %s242 = scalar_select %p241, %s17, 1
          %s243 = smul.addr %s242, 4
          %s244 = smul.addr %s243, 8
          %s245 = scalar_lea.vmem %s0, %s244
        $region40: #{tpu_custom_call.1} parent=35 // pred_fallthru
          _
      $region36: #{tpu_custom_call.1} parent=5 // pred_fallthru
        _
      %p246 = scmp.le.s32.totalorder 1, %s17
      %p247 = scmp.lt.s32.totalorder %s17, 3
      %p248 = pnand %p246, %p247
      %p249 = pneg %p248
      // Predicated region
      $region41: #{tpu_custom_call.1} parent=5 // pred_check
        _
      $region42: #{tpu_custom_call.1} parent=5 // pred_check_branch
        %251 = sbr.rel (%p248) target = $region44
      $region43: #{tpu_custom_call.1} parent=5 // pred_region
        %s252 = ssub.s32 %s17, 1
        // Predicated region
        $region45: #{tpu_custom_call.1} parent=43 // pred_check
          %p253 = pneg %p85
        $region46: #{tpu_custom_call.1} parent=43 // pred_check_branch
          %255 = sbr.rel (%p253) target = $region48
        $region47: #{tpu_custom_call.1} parent=43 // pred_region
          %256 = dma.done [#allocation3], 256
        $region48: #{tpu_custom_call.1} parent=43 // pred_fallthru
          _
        // Predicated region
        $region49: #{tpu_custom_call.1} parent=43 // pred_check
          %p257 = pneg %p106
        $region50: #{tpu_custom_call.1} parent=43 // pred_check_branch
          %259 = sbr.rel (%p257) target = $region52
        $region51: #{tpu_custom_call.1} parent=43 // pred_region
          %260 = dma.done [#allocation6], 1024
        $region52: #{tpu_custom_call.1} parent=43 // pred_fallthru
          _
        // Predicated region
        $region53: #{tpu_custom_call.1} parent=43 // pred_check
          %p261 = pneg %p127
        $region54: #{tpu_custom_call.1} parent=43 // pred_check_branch
          %263 = sbr.rel (%p261) target = $region56
        $region55: #{tpu_custom_call.1} parent=43 // pred_region
          %264 = dma.done [#allocation6], 512
        $region56: #{tpu_custom_call.1} parent=43 // pred_fallthru
          _
        %p265 = scmp.lt.s32.totalorder %s22, 1
        %s266 = scalar_select %p265, %s22, 1
        %s267 = smul.addr %s266, 4
        %s268 = smul.addr %s267, 8
        %s269 = scalar_lea.vmem %s0, %s268
        %p270 = pneg %p43
        %p271 = pneg %p40
        %p272 = pneg %p64
        %p273 = pneg %p61
        %p274 = pneg %p85
        %p275 = pneg %p82
        %p276 = pneg %p106
        %p277 = pneg %p103
        %p278 = pneg %p127
        %p279 = pneg %p124
        %p280 = pneg %p148
        %p281 = pneg %p145
        %p282 = pneg %p174
        %p283 = pneg %p171
        %s284 = sand.u32 %s161, 1
        %s285 = scalar_lea.sflag [#allocation4], %s284
        %s286 = sand.u32 %s161, 1
        %s287 = smul.addr %s286, 64
        %s288 = scalar_lea.vmem [#allocation8], %s287
        %p289 = scmp.lt.s32.totalorder %s22, 1
        %s290 = scalar_select %p289, %s22, 1
        %s291 = smul.addr %s290, 4
        %s292 = smul.addr %s291, 8
        %s293 = scalar_lea.vmem %s0, %s292
        %v295 = vld [vmem:[%s5] sm:$0xff]
        %v296 = vld [vmem:[%s5 + $0x8] sm:$0xff]
        %v297 = vld [vmem:[%s5 + $0x10] sm:$0xff]
        %v298 = vld [vmem:[%s5 + $0x18] sm:$0xff]
        %v299 = vld [vmem:[%s5 + $0x20] sm:$0xff]
        %v300 = vld [vmem:[%s5 + $0x28] sm:$0xff]
        %v301 = vld [vmem:[%s5 + $0x30] sm:$0xff]
        %v302 = vld [vmem:[%s5 + $0x38] sm:$0xff]
        %v303 = vld [vmem:[%s1] sm:$0xf]
        %v304 = vld [vmem:[%s1 + $0x4] sm:$0xf]
        %v305 = vld [vmem:[%s1 + $0x8] sm:$0xf]
        %v306 = vld [vmem:[%s1 + $0xc] sm:$0xf]
        %v307 = vld [vmem:[#allocation2] sm:$0xf]
        %v308 = vld [vmem:[#allocation2 + $0x4] sm:$0xf]
        %v309 = vld [vmem:[#allocation2 + $0x8] sm:$0xf]
        %v310 = vld [vmem:[#allocation2 + $0xc] sm:$0xf]
        %v311 = vld [vmem:[#allocation5] sm:$0xf]
        %v312 = vld [vmem:[#allocation5 + $0x4] sm:$0xf]
        %v313 = vld [vmem:[#allocation5 + $0x8] sm:$0xf]
        %v314 = vld [vmem:[#allocation5 + $0xc] sm:$0xf]
        %v315 = vld [vmem:[#allocation5 + $0x10] sm:$0xf]
        %v316 = vld [vmem:[#allocation5 + $0x14] sm:$0xf]
        %v317 = vld [vmem:[#allocation5 + $0x18] sm:$0xf]
        %v318 = vld [vmem:[#allocation5 + $0x1c] sm:$0xf]
        %v319 = vld [vmem:[#allocation5 + $0x20] sm:$0xf]
        %v320 = vld [vmem:[#allocation5 + $0x24] sm:$0xf]
        %v321 = vld [vmem:[#allocation5 + $0x28] sm:$0xf]
        %v322 = vld [vmem:[#allocation5 + $0x2c] sm:$0xf]
        %v323 = vld [vmem:[#allocation5 + $0x30] sm:$0xf]
        %v324 = vld [vmem:[#allocation5 + $0x34] sm:$0xf]
        %v325 = vld [vmem:[#allocation5 + $0x38] sm:$0xf]
        %v326 = vld [vmem:[#allocation5 + $0x3c] sm:$0xf]
        %v327 = vld [vmem:[#allocation7] sm:$0xf]
        %v328 = vld [vmem:[#allocation7 + $0x4] sm:$0xf]
        %v329 = vld [vmem:[#allocation7 + $0x8] sm:$0xf]
        %v330 = vld [vmem:[#allocation7 + $0xc] sm:$0xf]
        %v331 = vld [vmem:[#allocation7 + $0x10] sm:$0xf]
        %v332 = vld [vmem:[#allocation7 + $0x14] sm:$0xf]
        %v333 = vld [vmem:[#allocation7 + $0x18] sm:$0xf]
        %v334 = vld [vmem:[#allocation7 + $0x1c] sm:$0xf]
        %v335 = vld [vmem:[%s293] sm:$0xff]
        %v336 = vld [vmem:[%s293 + $0x8] sm:$0xff]
        %v337 = vld [vmem:[%s293 + $0x10] sm:$0xff]
        %v338 = vld [vmem:[%s293 + $0x18] sm:$0xff]
        %339 = vadd.xlane.f32.xlu0 %v335
        %v340 = vpop.xlane.xlu0 %339
        %341 = vadd.xlane.f32.xlu0 %v336
        %v342 = vpop.xlane.xlu0 %341
        %343 = vadd.xlane.f32.xlu0 %v337
        %v344 = vpop.xlane.xlu0 %343
        %345 = vadd.xlane.f32.xlu0 %v338
        %v346 = vpop.xlane.xlu0 %345
        %v347 = vrot.slane %v340, 4
        %v348 = vadd.f32 %v340, %v347
        %v349 = vrot.slane %v348, 2
        %v350 = vadd.f32 %v348, %v349
        %v351 = vrot.slane %v350, 1
        %v352 = vadd.f32 %v350, %v351
        %v353 = vrot.slane %v342, 4
        %v354 = vadd.f32 %v342, %v353
        %v355 = vrot.slane %v354, 2
        %v356 = vadd.f32 %v354, %v355
        %v357 = vrot.slane %v356, 1
        %v358 = vadd.f32 %v356, %v357
        %v359 = vrot.slane %v344, 4
        %v360 = vadd.f32 %v344, %v359
        %v361 = vrot.slane %v360, 2
        %v362 = vadd.f32 %v360, %v361
        %v363 = vrot.slane %v362, 1
        %v364 = vadd.f32 %v362, %v363
        %v365 = vrot.slane %v346, 4
        %v366 = vadd.f32 %v346, %v365
        %v367 = vrot.slane %v366, 2
        %v368 = vadd.f32 %v366, %v367
        %v369 = vrot.slane %v368, 1
        %v370 = vadd.f32 %v368, %v369
        %v371 = vmul.f32 %v335, %v335
        %v372 = vmul.f32 %v336, %v336
        %v373 = vmul.f32 %v337, %v337
        %v374 = vmul.f32 %v338, %v338
        %375 = vadd.xlane.f32.xlu0 %v371
        %v376 = vpop.xlane.xlu0 %375
        %377 = vadd.xlane.f32.xlu0 %v372
        %v378 = vpop.xlane.xlu0 %377
        %379 = vadd.xlane.f32.xlu0 %v373
        %v380 = vpop.xlane.xlu0 %379
        %381 = vadd.xlane.f32.xlu0 %v374
        %v382 = vpop.xlane.xlu0 %381
        %v383 = vrot.slane %v376, 4
        %v384 = vadd.f32 %v376, %v383
        %v385 = vrot.slane %v384, 2
        %v386 = vadd.f32 %v384, %v385
        %v387 = vrot.slane %v386, 1
        %v388 = vadd.f32 %v386, %v387
        %v389 = vrot.slane %v378, 4
        %v390 = vadd.f32 %v378, %v389
        %v391 = vrot.slane %v390, 2
        %v392 = vadd.f32 %v390, %v391
        %v393 = vrot.slane %v392, 1
        %v394 = vadd.f32 %v392, %v393
        %v395 = vrot.slane %v380, 4
        %v396 = vadd.f32 %v380, %v395
        %v397 = vrot.slane %v396, 2
        %v398 = vadd.f32 %v396, %v397
        %v399 = vrot.slane %v398, 1
        %v400 = vadd.f32 %v398, %v399
        %v401 = vrot.slane %v382, 4
        %v402 = vadd.f32 %v382, %v401
        %v403 = vrot.slane %v402, 2
        %v404 = vadd.f32 %v402, %v403
        %v405 = vrot.slane %v404, 1
        %v406 = vadd.f32 %v404, %v405
        %v407 = vrcp.pop 1024.0
        %v408 = vmul.f32 %v352, %v407
        %v409 = vmul.f32 %v358, %v407
        %v410 = vmul.f32 %v364, %v407
        %v411 = vmul.f32 %v370, %v407
        %v412 = vmul.f32 %v388, %v407
        %v413 = vmul.f32 %v394, %v407
        %v414 = vmul.f32 %v400, %v407
        %v415 = vmul.f32 %v406, %v407
        %v416 = vmul.f32 %v408, %v408
        %v417 = vmul.f32 %v409, %v409
        %v418 = vmul.f32 %v410, %v410
        %v419 = vmul.f32 %v411, %v411
        %v420 = vsub.f32 %v412, %v416
        %v421 = vsub.f32 %v413, %v417
        %v422 = vsub.f32 %v414, %v418
        %v423 = vsub.f32 %v415, %v419
        %v424 = vmax.f32 %v420, 0.0
        %v425 = vmax.f32 %v421, 0.0
        %v426 = vmax.f32 %v422, 0.0
        %v427 = vmax.f32 %v423, 0.0
        %v428 = vsub.f32 %v335, %v408
        %v429 = vsub.f32 %v336, %v409
        %v430 = vsub.f32 %v337, %v410
        %v431 = vsub.f32 %v338, %v411
        %v432 = vadd.f32 %v424, 1e-05
        %v433 = vadd.f32 %v425, 1e-05
        %v434 = vadd.f32 %v426, 1e-05
        %v435 = vadd.f32 %v427, 1e-05
        %v436 = vrsqrt.pop %v432
        %v437 = vrsqrt.pop %v433
        %v438 = vrsqrt.pop %v434
        %v439 = vrsqrt.pop %v435
        %v440 = vmul.f32 %v428, %v436
        %v441 = vmul.f32 %v429, %v437
        %v442 = vmul.f32 %v430, %v438
        %v443 = vmul.f32 %v431, %v439
        %445 = vset.pattern.permute.xlu0 0
        %446 = vperm.xlu0 %445, %v295
        %v447 = vpop.permute.xlu0 %446
        %450 = vset.pattern.permute.xlu0 0
        %451 = vperm.xlu0 %450, %v296
        %v452 = vpop.permute.xlu0 %451
        %455 = vset.pattern.permute.xlu0 0
        %456 = vperm.xlu0 %455, %v297
        %v457 = vpop.permute.xlu0 %456
        %460 = vset.pattern.permute.xlu0 0
        %461 = vperm.xlu0 %460, %v298
        %v462 = vpop.permute.xlu0 %461
        %v464 = vmul.f32 %v440, %v447
        %v465 = vmul.f32 %v441, %v452
        %v466 = vmul.f32 %v442, %v457
        %v467 = vmul.f32 %v443, %v462
        %468 = vset.pattern.permute.xlu0 1
        %469 = vperm.xlu0 %468, %v295
        %v470 = vpop.permute.xlu0 %469
        %472 = vset.pattern.permute.xlu0 1
        %473 = vperm.xlu0 %472, %v296
        %v474 = vpop.permute.xlu0 %473
        %476 = vset.pattern.permute.xlu0 1
        %477 = vperm.xlu0 %476, %v297
        %v478 = vpop.permute.xlu0 %477
        %480 = vset.pattern.permute.xlu0 1
        %481 = vperm.xlu0 %480, %v298
        %v482 = vpop.permute.xlu0 %481
        %v484 = vadd.f32 %v464, %v470
        %v485 = vadd.f32 %v465, %v474
        %v486 = vadd.f32 %v466, %v478
        %v487 = vadd.f32 %v467, %v482
        %v488 = vmax.f32 %v484, 0.0
        %v489 = vmax.f32 %v485, 0.0
        %v490 = vmax.f32 %v486, 0.0
        %v491 = vmax.f32 %v487, 0.0
        %v492 = vpack.c.bf16 %v489, %v488
        %v493 = vpack.c.bf16 %v491, %v490
        %494 = vset.pattern.permute.xlu0 4
        %495 = vperm.xlu0 %494, %v295
        %v496 = vpop.permute.xlu0 %495
        %498 = vset.pattern.permute.xlu0 4
        %499 = vperm.xlu0 %498, %v296
        %v500 = vpop.permute.xlu0 %499
        %502 = vset.pattern.permute.xlu0 4
        %503 = vperm.xlu0 %502, %v297
        %v504 = vpop.permute.xlu0 %503
        %506 = vset.pattern.permute.xlu0 4
        %507 = vperm.xlu0 %506, %v298
        %v508 = vpop.permute.xlu0 %507
        %v514 = vunpack.c.l.b16 %v303
        %v515 = vunpack.c.l.b16 %v304
        %v516 = vunpack.c.l.b16 %v305
        %v517 = vunpack.c.l.b16 %v306
        %v518 = vpack.c.b16 %v515, %v514
        %v519 = vpack.c.b16 %v517, %v516
        %vm520 = vcmask 261120
        %v522 = vsel %vm520, %v518, 0
        %v525 = vsel %vm520, %v519, 0
        %527 = vmatprep.subr.bf16.mxu0 0
        %528 = vmatpush1.bf16.msra.mxu0 %v492
        %529 = vmatprep.subr.bf16.mxu0 0
        %530 = vmatpush1.bf16.msra.mxu0 %v493
        %531 = vmatprep.subr.bf16.mxu0 0
        %532 = vmatpush1.bf16.msra.mxu0 0
        %533 = vmatprep.subr.bf16.mxu0 0
        %534 = vmatpush1.bf16.msra.mxu0 0
        %535 = vmatprep.subr.bf16.mxu0 0
        %536 = vmatpush1.bf16.msra.mxu0 0
        %537 = vmatprep.subr.bf16.mxu0 0
        %538 = vmatpush1.bf16.msra.mxu0 0
        %539 = vmatprep.subr.bf16.mxu0 0
        %540 = vmatpush1.bf16.msra.mxu0 0
        %541 = vmatprep.subr.bf16.mxu0 0
        %542 = vmatpush1.bf16.msra.mxu0 0
        %543 = vmatprep.subr.bf16.mxu0 0
        %544 = vmatpush1.bf16.msra.mxu0 0
        %545 = vmatprep.subr.bf16.mxu0 0
        %546 = vmatpush1.bf16.msra.mxu0 0
        %547 = vmatprep.subr.bf16.mxu0 0
        %548 = vmatpush1.bf16.msra.mxu0 0
        %549 = vmatprep.subr.bf16.mxu0 0
        %550 = vmatpush1.bf16.msra.mxu0 0
        %551 = vmatprep.subr.bf16.mxu0 0
        %552 = vmatpush1.bf16.msra.mxu0 0
        %553 = vmatprep.subr.bf16.mxu0 0
        %554 = vmatpush1.bf16.msra.mxu0 0
        %555 = vmatprep.subr.bf16.mxu0 0
        %556 = vmatpush1.bf16.msra.mxu0 0
        %557 = vmatprep.subr.bf16.mxu0 0
        %558 = vmatpush1.bf16.msra.mxu0 0
        %559 = vmatprep.mubr.bf16.mxu0 0
        %560 = vmatmul.mubr.bf16.gmra.mrb[0].mxu0 %v522
        %v561 = vpop.f32.mrb[0].mxu0
        %v562 = vadd.f32 %v496, %v561
        %v563 = vpop.f32.mrb[0].mxu0
        %v564 = vpop.f32.mrb[0].mxu0
        %v565 = vadd.f32 %v500, %v564
        %v566 = vpop.f32.mrb[0].mxu0
        %567 = vmatprep.mubr.bf16.mxu0 0
        %568 = vmatmul.mubr.bf16.gmra.mrb[0].mxu0 %v525
        %v569 = vpop.f32.mrb[0].mxu0
        %v570 = vadd.f32 %v504, %v569
        %v571 = vpop.f32.mrb[0].mxu0
        %v572 = vpop.f32.mrb[0].mxu0
        %v573 = vadd.f32 %v508, %v572
        %v574 = vpop.f32.mrb[0].mxu0
        %575 = vdwg.mxu0
        %576 = vadd.xlane.f32.xlu0 %v562
        %v577 = vpop.xlane.xlu0 %576
        %578 = vadd.xlane.f32.xlu0 %v565
        %v579 = vpop.xlane.xlu0 %578
        %580 = vadd.xlane.f32.xlu0 %v570
        %v581 = vpop.xlane.xlu0 %580
        %582 = vadd.xlane.f32.xlu0 %v573
        %v583 = vpop.xlane.xlu0 %582
        %v584 = vrot.slane %v577, 4
        %v585 = vadd.f32 %v577, %v584
        %v586 = vrot.slane %v585, 2
        %v587 = vadd.f32 %v585, %v586
        %v588 = vrot.slane %v587, 1
        %v589 = vadd.f32 %v587, %v588
        %v590 = vrot.slane %v579, 4
        %v591 = vadd.f32 %v579, %v590
        %v592 = vrot.slane %v591, 2
        %v593 = vadd.f32 %v591, %v592
        %v594 = vrot.slane %v593, 1
        %v595 = vadd.f32 %v593, %v594
        %v596 = vrot.slane %v581, 4
        %v597 = vadd.f32 %v581, %v596
        %v598 = vrot.slane %v597, 2
        %v599 = vadd.f32 %v597, %v598
        %v600 = vrot.slane %v599, 1
        %v601 = vadd.f32 %v599, %v600
        %v602 = vrot.slane %v583, 4
        %v603 = vadd.f32 %v583, %v602
        %v604 = vrot.slane %v603, 2
        %v605 = vadd.f32 %v603, %v604
        %v606 = vrot.slane %v605, 1
        %v607 = vadd.f32 %v605, %v606
        %v608 = vmul.f32 %v562, %v562
        %v609 = vmul.f32 %v565, %v565
        %v610 = vmul.f32 %v570, %v570
        %v611 = vmul.f32 %v573, %v573
        %612 = vadd.xlane.f32.xlu0 %v608
        %v613 = vpop.xlane.xlu0 %612
        %614 = vadd.xlane.f32.xlu0 %v609
        %v615 = vpop.xlane.xlu0 %614
        %616 = vadd.xlane.f32.xlu0 %v610
        %v617 = vpop.xlane.xlu0 %616
        %618 = vadd.xlane.f32.xlu0 %v611
        %v619 = vpop.xlane.xlu0 %618
        %v620 = vrot.slane %v613, 4
        %v621 = vadd.f32 %v613, %v620
        %v622 = vrot.slane %v621, 2
        %v623 = vadd.f32 %v621, %v622
        %v624 = vrot.slane %v623, 1
        %v625 = vadd.f32 %v623, %v624
        %v626 = vrot.slane %v615, 4
        %v627 = vadd.f32 %v615, %v626
        %v628 = vrot.slane %v627, 2
        %v629 = vadd.f32 %v627, %v628
        %v630 = vrot.slane %v629, 1
        %v631 = vadd.f32 %v629, %v630
        %v632 = vrot.slane %v617, 4
        %v633 = vadd.f32 %v617, %v632
        %v634 = vrot.slane %v633, 2
        %v635 = vadd.f32 %v633, %v634
        %v636 = vrot.slane %v635, 1
        %v637 = vadd.f32 %v635, %v636
        %v638 = vrot.slane %v619, 4
        %v639 = vadd.f32 %v619, %v638
        %v640 = vrot.slane %v639, 2
        %v641 = vadd.f32 %v639, %v640
        %v642 = vrot.slane %v641, 1
        %v643 = vadd.f32 %v641, %v642
        %v644 = vmul.f32 %v589, %v407
        %v645 = vmul.f32 %v595, %v407
        %v646 = vmul.f32 %v601, %v407
        %v647 = vmul.f32 %v607, %v407
        %v648 = vmul.f32 %v625, %v407
        %v649 = vmul.f32 %v631, %v407
        %v650 = vmul.f32 %v637, %v407
        %v651 = vmul.f32 %v643, %v407
        %v652 = vmul.f32 %v644, %v644
        %v653 = vmul.f32 %v645, %v645
        %v654 = vmul.f32 %v646, %v646
        %v655 = vmul.f32 %v647, %v647
        %v656 = vsub.f32 %v648, %v652
        %v657 = vsub.f32 %v649, %v653
        %v658 = vsub.f32 %v650, %v654
        %v659 = vsub.f32 %v651, %v655
        %v660 = vmax.f32 %v656, 0.0
        %v661 = vmax.f32 %v657, 0.0
        %v662 = vmax.f32 %v658, 0.0
        %v663 = vmax.f32 %v659, 0.0
        %v664 = vsub.f32 %v562, %v644
        %v665 = vsub.f32 %v565, %v645
        %v666 = vsub.f32 %v570, %v646
        %v667 = vsub.f32 %v573, %v647
        %v668 = vadd.f32 %v660, 1e-05
        %v669 = vadd.f32 %v661, 1e-05
        %v670 = vadd.f32 %v662, 1e-05
        %v671 = vadd.f32 %v663, 1e-05
        %v672 = vrsqrt.pop %v668
        %v673 = vrsqrt.pop %v669
        %v674 = vrsqrt.pop %v670
        %v675 = vrsqrt.pop %v671
        %v676 = vmul.f32 %v664, %v672
        %v677 = vmul.f32 %v665, %v673
        %v678 = vmul.f32 %v666, %v674
        %v679 = vmul.f32 %v667, %v675
        %680 = vset.pattern.permute.xlu0 2
        %681 = vperm.xlu0 %680, %v295
        %v682 = vpop.permute.xlu0 %681
        %684 = vset.pattern.permute.xlu0 2
        %685 = vperm.xlu0 %684, %v296
        %v686 = vpop.permute.xlu0 %685
        %688 = vset.pattern.permute.xlu0 2
        %689 = vperm.xlu0 %688, %v297
        %v690 = vpop.permute.xlu0 %689
        %692 = vset.pattern.permute.xlu0 2
        %693 = vperm.xlu0 %692, %v298
        %v694 = vpop.permute.xlu0 %693
        %v696 = vmul.f32 %v676, %v682
        %v697 = vmul.f32 %v677, %v686
        %v698 = vmul.f32 %v678, %v690
        %v699 = vmul.f32 %v679, %v694
        %700 = vset.pattern.permute.xlu0 3
        %701 = vperm.xlu0 %700, %v295
        %v702 = vpop.permute.xlu0 %701
        %704 = vset.pattern.permute.xlu0 3
        %705 = vperm.xlu0 %704, %v296
        %v706 = vpop.permute.xlu0 %705
        %708 = vset.pattern.permute.xlu0 3
        %709 = vperm.xlu0 %708, %v297
        %v710 = vpop.permute.xlu0 %709
        %712 = vset.pattern.permute.xlu0 3
        %713 = vperm.xlu0 %712, %v298
        %v714 = vpop.permute.xlu0 %713
        %v716 = vadd.f32 %v696, %v702
        %v717 = vadd.f32 %v697, %v706
        %v718 = vadd.f32 %v698, %v710
        %v719 = vadd.f32 %v699, %v714
        %v720 = vmax.f32 %v716, 0.0
        %v721 = vmax.f32 %v717, 0.0
        %v722 = vmax.f32 %v718, 0.0
        %v723 = vmax.f32 %v719, 0.0
        %v724 = vpack.c.bf16 %v721, %v720
        %v725 = vpack.c.bf16 %v723, %v722
        %v730 = vunpack.c.l.b16 %v307
        %v731 = vunpack.c.l.b16 %v308
        %v732 = vunpack.c.l.b16 %v309
        %v733 = vunpack.c.l.b16 %v310
        %v734 = vpack.c.b16 %v731, %v730
        %v735 = vpack.c.b16 %v733, %v732
        %v737 = vsel %vm520, %v734, 0
        %v740 = vsel %vm520, %v735, 0
        %742 = vmatprep.subr.bf16.mxu0 0
        %743 = vmatpush1.bf16.msra.mxu0 %v724
        %744 = vmatprep.subr.bf16.mxu0 0
        %745 = vmatpush1.bf16.msra.mxu0 %v725
        %746 = vmatprep.subr.bf16.mxu0 0
        %747 = vmatpush1.bf16.msra.mxu0 0
        %748 = vmatprep.subr.bf16.mxu0 0
        %749 = vmatpush1.bf16.msra.mxu0 0
        %750 = vmatprep.subr.bf16.mxu0 0
        %751 = vmatpush1.bf16.msra.mxu0 0
        %752 = vmatprep.subr.bf16.mxu0 0
        %753 = vmatpush1.bf16.msra.mxu0 0
        %754 = vmatprep.subr.bf16.mxu0 0
        %755 = vmatpush1.bf16.msra.mxu0 0
        %756 = vmatprep.subr.bf16.mxu0 0
        %757 = vmatpush1.bf16.msra.mxu0 0
        %758 = vmatprep.subr.bf16.mxu0 0
        %759 = vmatpush1.bf16.msra.mxu0 0
        %760 = vmatprep.subr.bf16.mxu0 0
        %761 = vmatpush1.bf16.msra.mxu0 0
        %762 = vmatprep.subr.bf16.mxu0 0
        %763 = vmatpush1.bf16.msra.mxu0 0
        %764 = vmatprep.subr.bf16.mxu0 0
        %765 = vmatpush1.bf16.msra.mxu0 0
        %766 = vmatprep.subr.bf16.mxu0 0
        %767 = vmatpush1.bf16.msra.mxu0 0
        %768 = vmatprep.subr.bf16.mxu0 0
        %769 = vmatpush1.bf16.msra.mxu0 0
        %770 = vmatprep.subr.bf16.mxu0 0
        %771 = vmatpush1.bf16.msra.mxu0 0
        %772 = vmatprep.subr.bf16.mxu0 0
        %773 = vmatpush1.bf16.msra.mxu0 0
        %774 = vmatprep.mubr.bf16.mxu0 0
        %775 = vmatmul.mubr.bf16.gmra.mrb[0].mxu0 %v737
        %v776 = vpop.f32.mrb[0].mxu0
        %v777 = vadd.f32 0.0, %v776
        %v778 = vpop.f32.mrb[0].mxu0
        %v779 = vpop.f32.mrb[0].mxu0
        %v780 = vadd.f32 0.0, %v779
        %v781 = vpop.f32.mrb[0].mxu0
        %782 = vmatprep.mubr.bf16.mxu0 0
        %783 = vmatmul.mubr.bf16.gmra.mrb[0].mxu0 %v740
        %v784 = vpop.f32.mrb[0].mxu0
        %v785 = vadd.f32 0.0, %v784
        %v786 = vpop.f32.mrb[0].mxu0
        %v787 = vpop.f32.mrb[0].mxu0
        %v788 = vadd.f32 0.0, %v787
        %v789 = vpop.f32.mrb[0].mxu0
        %790 = vdwg.mxu0
        %v791 = vpack.c.bf16 %v780, %v777
        %v792 = vpack.c.bf16 %v788, %v785
        %793 = vset.pattern.permute.xlu0 7
        %794 = vperm.xlu0 %793, %v295
        %v795 = vpop.permute.xlu0 %794
        %797 = vset.pattern.permute.xlu0 7
        %798 = vperm.xlu0 %797, %v296
        %v799 = vpop.permute.xlu0 %798
        %801 = vset.pattern.permute.xlu0 7
        %802 = vperm.xlu0 %801, %v297
        %v803 = vpop.permute.xlu0 %802
        %805 = vset.pattern.permute.xlu0 7
        %806 = vperm.xlu0 %805, %v298
        %v807 = vpop.permute.xlu0 %806
        %v825 = vunpack.c.l.b16 %v311
        %v826 = vunpack.c.l.b16 %v312
        %v827 = vunpack.c.l.b16 %v313
        %v828 = vunpack.c.l.b16 %v314
        %v829 = vunpack.c.l.b16 %v315
        %v830 = vunpack.c.l.b16 %v316
        %v831 = vunpack.c.l.b16 %v317
        %v832 = vunpack.c.l.b16 %v318
        %v833 = vunpack.c.l.b16 %v319
        %v834 = vunpack.c.l.b16 %v320
        %v835 = vunpack.c.l.b16 %v321
        %v836 = vunpack.c.l.b16 %v322
        %v837 = vunpack.c.l.b16 %v323
        %v838 = vunpack.c.l.b16 %v324
        %v839 = vunpack.c.l.b16 %v325
        %v840 = vunpack.c.l.b16 %v326
        %v841 = vpack.c.b16 %v826, %v825
        %v842 = vpack.c.b16 %v828, %v827
        %v843 = vpack.c.b16 %v830, %v829
        %v844 = vpack.c.b16 %v832, %v831
        %v845 = vpack.c.b16 %v834, %v833
        %v846 = vpack.c.b16 %v836, %v835
        %v847 = vpack.c.b16 %v838, %v837
        %v848 = vpack.c.b16 %v840, %v839
        %857 = vmatprep.subr.bf16.mxu0 0
        %858 = vmatpush1.bf16.msra.mxu0 %v841
        %859 = vmatprep.subr.bf16.mxu0 0
        %860 = vmatpush1.bf16.msra.mxu0 %v842
        %861 = vmatprep.subr.bf16.mxu0 0
        %862 = vmatpush1.bf16.msra.mxu0 %v843
        %863 = vmatprep.subr.bf16.mxu0 0
        %864 = vmatpush1.bf16.msra.mxu0 %v844
        %865 = vmatprep.subr.bf16.mxu0 0
        %866 = vmatpush1.bf16.msra.mxu0 %v845
        %867 = vmatprep.subr.bf16.mxu0 0
        %868 = vmatpush1.bf16.msra.mxu0 %v846
        %869 = vmatprep.subr.bf16.mxu0 0
        %870 = vmatpush1.bf16.msra.mxu0 %v847
        %871 = vmatprep.subr.bf16.mxu0 0
        %872 = vmatpush1.bf16.msra.mxu0 %v848
        %873 = vmatprep.subr.bf16.mxu0 0
        %874 = vmatpush1.bf16.msra.mxu0 0
        %875 = vmatprep.subr.bf16.mxu0 0
        %876 = vmatpush1.bf16.msra.mxu0 0
        %877 = vmatprep.subr.bf16.mxu0 0
        %878 = vmatpush1.bf16.msra.mxu0 0
        %879 = vmatprep.subr.bf16.mxu0 0
        %880 = vmatpush1.bf16.msra.mxu0 0
        %881 = vmatprep.subr.bf16.mxu0 0
        %882 = vmatpush1.bf16.msra.mxu0 0
        %883 = vmatprep.subr.bf16.mxu0 0
        %884 = vmatpush1.bf16.msra.mxu0 0
        %885 = vmatprep.subr.bf16.mxu0 0
        %886 = vmatpush1.bf16.msra.mxu0 0
        %887 = vmatprep.subr.bf16.mxu0 0
        %888 = vmatpush1.bf16.msra.mxu0 0
        %889 = vmatprep.mubr.bf16.mxu0 0
        %890 = vmatmul.mubr.bf16.gmra.mrb[0].mxu0 %v791
        %v891 = vpop.f32.mrb[0].mxu0
        %v892 = vadd.f32 %v795, %v891
        %v893 = vpop.f32.mrb[0].mxu0
        %v894 = vpop.f32.mrb[0].mxu0
        %v895 = vadd.f32 %v799, %v894
        %v896 = vpop.f32.mrb[0].mxu0
        %897 = vmatprep.mubr.bf16.mxu0 0
        %898 = vmatmul.mubr.bf16.gmra.mrb[0].mxu0 %v792
        %v899 = vpop.f32.mrb[0].mxu0
        %v900 = vadd.f32 %v803, %v899
        %v901 = vpop.f32.mrb[0].mxu0
        %v902 = vpop.f32.mrb[0].mxu0
        %v903 = vadd.f32 %v807, %v902
        %v904 = vpop.f32.mrb[0].mxu0
        %905 = vdwg.mxu0
        %906 = vadd.xlane.f32.xlu0 %v892
        %v907 = vpop.xlane.xlu0 %906
        %908 = vadd.xlane.f32.xlu0 %v895
        %v909 = vpop.xlane.xlu0 %908
        %910 = vadd.xlane.f32.xlu0 %v900
        %v911 = vpop.xlane.xlu0 %910
        %912 = vadd.xlane.f32.xlu0 %v903
        %v913 = vpop.xlane.xlu0 %912
        %v914 = vrot.slane %v907, 4
        %v915 = vadd.f32 %v907, %v914
        %v916 = vrot.slane %v915, 2
        %v917 = vadd.f32 %v915, %v916
        %v918 = vrot.slane %v917, 1
        %v919 = vadd.f32 %v917, %v918
        %v920 = vrot.slane %v909, 4
        %v921 = vadd.f32 %v909, %v920
        %v922 = vrot.slane %v921, 2
        %v923 = vadd.f32 %v921, %v922
        %v924 = vrot.slane %v923, 1
        %v925 = vadd.f32 %v923, %v924
        %v926 = vrot.slane %v911, 4
        %v927 = vadd.f32 %v911, %v926
        %v928 = vrot.slane %v927, 2
        %v929 = vadd.f32 %v927, %v928
        %v930 = vrot.slane %v929, 1
        %v931 = vadd.f32 %v929, %v930
        %v932 = vrot.slane %v913, 4
        %v933 = vadd.f32 %v913, %v932
        %v934 = vrot.slane %v933, 2
        %v935 = vadd.f32 %v933, %v934
        %v936 = vrot.slane %v935, 1
        %v937 = vadd.f32 %v935, %v936
        %v938 = vmul.f32 %v892, %v892
        %v939 = vmul.f32 %v895, %v895
        %v940 = vmul.f32 %v900, %v900
        %v941 = vmul.f32 %v903, %v903
        %942 = vadd.xlane.f32.xlu0 %v938
        %v943 = vpop.xlane.xlu0 %942
        %944 = vadd.xlane.f32.xlu0 %v939
        %v945 = vpop.xlane.xlu0 %944
        %946 = vadd.xlane.f32.xlu0 %v940
        %v947 = vpop.xlane.xlu0 %946
        %948 = vadd.xlane.f32.xlu0 %v941
        %v949 = vpop.xlane.xlu0 %948
        %v950 = vrot.slane %v943, 4
        %v951 = vadd.f32 %v943, %v950
        %v952 = vrot.slane %v951, 2
        %v953 = vadd.f32 %v951, %v952
        %v954 = vrot.slane %v953, 1
        %v955 = vadd.f32 %v953, %v954
        %v956 = vrot.slane %v945, 4
        %v957 = vadd.f32 %v945, %v956
        %v958 = vrot.slane %v957, 2
        %v959 = vadd.f32 %v957, %v958
        %v960 = vrot.slane %v959, 1
        %v961 = vadd.f32 %v959, %v960
        %v962 = vrot.slane %v947, 4
        %v963 = vadd.f32 %v947, %v962
        %v964 = vrot.slane %v963, 2
        %v965 = vadd.f32 %v963, %v964
        %v966 = vrot.slane %v965, 1
        %v967 = vadd.f32 %v965, %v966
        %v968 = vrot.slane %v949, 4
        %v969 = vadd.f32 %v949, %v968
        %v970 = vrot.slane %v969, 2
        %v971 = vadd.f32 %v969, %v970
        %v972 = vrot.slane %v971, 1
        %v973 = vadd.f32 %v971, %v972
        %v974 = vmul.f32 %v919, %v407
        %v975 = vmul.f32 %v925, %v407
        %v976 = vmul.f32 %v931, %v407
        %v977 = vmul.f32 %v937, %v407
        %v978 = vmul.f32 %v955, %v407
        %v979 = vmul.f32 %v961, %v407
        %v980 = vmul.f32 %v967, %v407
        %v981 = vmul.f32 %v973, %v407
        %v982 = vmul.f32 %v974, %v974
        %v983 = vmul.f32 %v975, %v975
        %v984 = vmul.f32 %v976, %v976
        %v985 = vmul.f32 %v977, %v977
        %v986 = vsub.f32 %v978, %v982
        %v987 = vsub.f32 %v979, %v983
        %v988 = vsub.f32 %v980, %v984
        %v989 = vsub.f32 %v981, %v985
        %v990 = vmax.f32 %v986, 0.0
        %v991 = vmax.f32 %v987, 0.0
        %v992 = vmax.f32 %v988, 0.0
        %v993 = vmax.f32 %v989, 0.0
        %v994 = vsub.f32 %v892, %v974
        %v995 = vsub.f32 %v895, %v975
        %v996 = vsub.f32 %v900, %v976
        %v997 = vsub.f32 %v903, %v977
        %v998 = vadd.f32 %v990, 1e-05
        %v999 = vadd.f32 %v991, 1e-05
        %v1000 = vadd.f32 %v992, 1e-05
        %v1001 = vadd.f32 %v993, 1e-05
        %v1002 = vrsqrt.pop %v998
        %v1003 = vrsqrt.pop %v999
        %v1004 = vrsqrt.pop %v1000
        %v1005 = vrsqrt.pop %v1001
        %v1006 = vmul.f32 %v994, %v1002
        %v1007 = vmul.f32 %v995, %v1003
        %v1008 = vmul.f32 %v996, %v1004
        %v1009 = vmul.f32 %v997, %v1005
        %1010 = vset.pattern.permute.xlu0 5
        %1011 = vperm.xlu0 %1010, %v295
        %v1012 = vpop.permute.xlu0 %1011
        %1014 = vset.pattern.permute.xlu0 5
        %1015 = vperm.xlu0 %1014, %v296
        %v1016 = vpop.permute.xlu0 %1015
        %1018 = vset.pattern.permute.xlu0 5
        %1019 = vperm.xlu0 %1018, %v297
        %v1020 = vpop.permute.xlu0 %1019
        %1022 = vset.pattern.permute.xlu0 5
        %1023 = vperm.xlu0 %1022, %v298
        %v1024 = vpop.permute.xlu0 %1023
        %v1026 = vmul.f32 %v1006, %v1012
        %v1027 = vmul.f32 %v1007, %v1016
        %v1028 = vmul.f32 %v1008, %v1020
        %v1029 = vmul.f32 %v1009, %v1024
        %1030 = vset.pattern.permute.xlu0 6
        %1031 = vperm.xlu0 %1030, %v295
        %v1032 = vpop.permute.xlu0 %1031
        %1034 = vset.pattern.permute.xlu0 6
        %1035 = vperm.xlu0 %1034, %v296
        %v1036 = vpop.permute.xlu0 %1035
        %1038 = vset.pattern.permute.xlu0 6
        %1039 = vperm.xlu0 %1038, %v297
        %v1040 = vpop.permute.xlu0 %1039
        %1042 = vset.pattern.permute.xlu0 6
        %1043 = vperm.xlu0 %1042, %v298
        %v1044 = vpop.permute.xlu0 %1043
        %v1046 = vadd.f32 %v1026, %v1032
        %v1047 = vadd.f32 %v1027, %v1036
        %v1048 = vadd.f32 %v1028, %v1040
        %v1049 = vadd.f32 %v1029, %v1044
        %v1050 = vmax.f32 %v1046, 0.0
        %v1051 = vmax.f32 %v1047, 0.0
        %v1052 = vmax.f32 %v1048, 0.0
        %v1053 = vmax.f32 %v1049, 0.0
        %v1054 = vpack.c.bf16 %v1051, %v1050
        %v1055 = vpack.c.bf16 %v1053, %v1052
        %v1056 = vpack.c.bf16 %v336, %v335
        %v1057 = vpack.c.bf16 %v338, %v337
        %1058 = vset.pattern.permute.xlu0 8
        %1059 = vperm.xlu0 %1058, %v295
        %v1060 = vpop.permute.xlu0 %1059
        %1062 = vset.pattern.permute.xlu0 8
        %1063 = vperm.xlu0 %1062, %v296
        %v1064 = vpop.permute.xlu0 %1063
        %1066 = vset.pattern.permute.xlu0 8
        %1067 = vperm.xlu0 %1066, %v297
        %v1068 = vpop.permute.xlu0 %1067
        %1070 = vset.pattern.permute.xlu0 8
        %1071 = vperm.xlu0 %1070, %v298
        %v1072 = vpop.permute.xlu0 %1071
        %1075 = vset.pattern.permute.xlu0 8
        %1076 = vperm.xlu0 %1075, %v299
        %v1077 = vpop.permute.xlu0 %1076
        %1080 = vset.pattern.permute.xlu0 8
        %1081 = vperm.xlu0 %1080, %v300
        %v1082 = vpop.permute.xlu0 %1081
        %1085 = vset.pattern.permute.xlu0 8
        %1086 = vperm.xlu0 %1085, %v301
        %v1087 = vpop.permute.xlu0 %1086
        %1090 = vset.pattern.permute.xlu0 8
        %1091 = vperm.xlu0 %1090, %v302
        %v1092 = vpop.permute.xlu0 %1091
        %v1102 = vunpack.c.l.b16 %v327
        %v1103 = vunpack.c.l.b16 %v328
        %v1104 = vunpack.c.l.b16 %v329
        %v1105 = vunpack.c.l.b16 %v330
        %v1106 = vunpack.c.l.b16 %v331
        %v1107 = vunpack.c.l.b16 %v332
        %v1108 = vunpack.c.l.b16 %v333
        %v1109 = vunpack.c.l.b16 %v334
        %v1110 = vpack.c.b16 %v1103, %v1102
        %v1111 = vpack.c.b16 %v1105, %v1104
        %v1112 = vpack.c.b16 %v1107, %v1106
        %v1113 = vpack.c.b16 %v1109, %v1108
        %vm1114 = vcmask 523264
        %v1116 = vsel %vm1114, %v1110, 0
        %v1119 = vsel %vm1114, %v1111, 0
        %v1122 = vsel %vm1114, %v1112, 0
        %v1125 = vsel %vm1114, %v1113, 0
        %1127 = vmatprep.subr.bf16.mxu0 0
        %1128 = vmatpush1.bf16.msra.mxu0 %v1054
        %1129 = vmatprep.subr.bf16.mxu0 0
        %1130 = vmatpush1.bf16.msra.mxu0 %v1055
        %1131 = vmatprep.subr.bf16.mxu0 0
        %1132 = vmatpush1.bf16.msra.mxu0 %v1056
        %1133 = vmatprep.subr.bf16.mxu0 0
        %1134 = vmatpush1.bf16.msra.mxu0 %v1057
        %1135 = vmatprep.subr.bf16.mxu0 0
        %1136 = vmatpush1.bf16.msra.mxu0 0
        %1137 = vmatprep.subr.bf16.mxu0 0
        %1138 = vmatpush1.bf16.msra.mxu0 0
        %1139 = vmatprep.subr.bf16.mxu0 0
        %1140 = vmatpush1.bf16.msra.mxu0 0
        %1141 = vmatprep.subr.bf16.mxu0 0
        %1142 = vmatpush1.bf16.msra.mxu0 0
        %1143 = vmatprep.subr.bf16.mxu0 0
        %1144 = vmatpush1.bf16.msra.mxu0 0
        %1145 = vmatprep.subr.bf16.mxu0 0
        %1146 = vmatpush1.bf16.msra.mxu0 0
        %1147 = vmatprep.subr.bf16.mxu0 0
        %1148 = vmatpush1.bf16.msra.mxu0 0
        %1149 = vmatprep.subr.bf16.mxu0 0
        %1150 = vmatpush1.bf16.msra.mxu0 0
        %1151 = vmatprep.subr.bf16.mxu0 0
        %1152 = vmatpush1.bf16.msra.mxu0 0
        %1153 = vmatprep.subr.bf16.mxu0 0
        %1154 = vmatpush1.bf16.msra.mxu0 0
        %1155 = vmatprep.subr.bf16.mxu0 0
        %1156 = vmatpush1.bf16.msra.mxu0 0
        %1157 = vmatprep.subr.bf16.mxu0 0
        %1158 = vmatpush1.bf16.msra.mxu0 0
        %1159 = vmatprep.mubr.bf16.mxu0 0
        %1160 = vmatmul.mubr.bf16.gmra.mrb[0].mxu0 %v1116
        %v1161 = vpop.f32.mrb[0].mxu0
        %v1162 = vadd.f32 %v1060, %v1161
        %v1163 = vpop.f32.mrb[0].mxu0
        %v1164 = vpop.f32.mrb[0].mxu0
        %v1165 = vadd.f32 %v1064, %v1164
        %v1166 = vpop.f32.mrb[0].mxu0
        %1167 = vmatprep.mubr.bf16.mxu0 0
        %1168 = vmatmul.mubr.bf16.gmra.mrb[0].mxu0 %v1119
        %v1169 = vpop.f32.mrb[0].mxu0
        %v1170 = vadd.f32 %v1068, %v1169
        %v1171 = vpop.f32.mrb[0].mxu0
        %v1172 = vpop.f32.mrb[0].mxu0
        %v1173 = vadd.f32 %v1072, %v1172
        %v1174 = vpop.f32.mrb[0].mxu0
        %1175 = vmatprep.mubr.bf16.mxu0 0
        %1176 = vmatmul.mubr.bf16.gmra.mrb[0].mxu0 %v1122
        %v1177 = vpop.f32.mrb[0].mxu0
        %v1178 = vadd.f32 %v1077, %v1177
        %v1179 = vpop.f32.mrb[0].mxu0
        %v1180 = vpop.f32.mrb[0].mxu0
        %v1181 = vadd.f32 %v1082, %v1180
        %v1182 = vpop.f32.mrb[0].mxu0
        %1183 = vmatprep.mubr.bf16.mxu0 0
        %1184 = vmatmul.mubr.bf16.gmra.mrb[0].mxu0 %v1125
        %v1185 = vpop.f32.mrb[0].mxu0
        %v1186 = vadd.f32 %v1087, %v1185
        %v1187 = vpop.f32.mrb[0].mxu0
        %v1188 = vpop.f32.mrb[0].mxu0
        %v1189 = vadd.f32 %v1092, %v1188
        %v1190 = vpop.f32.mrb[0].mxu0
        %1191 = vdwg.mxu0
        %1192 = vst [vmem:[%s288] sm:$0xff] %v1162
        %1193 = vst [vmem:[%s288 + $0x8] sm:$0xff] %v1165
        %1194 = vst [vmem:[%s288 + $0x10] sm:$0xff] %v1170
        %1195 = vst [vmem:[%s288 + $0x18] sm:$0xff] %v1173
        %1196 = vst [vmem:[%s288 + $0x20] sm:$0xff] %v1178
        %1197 = vst [vmem:[%s288 + $0x28] sm:$0xff] %v1181
        %1198 = vst [vmem:[%s288 + $0x30] sm:$0xff] %v1186
        %1199 = vst [vmem:[%s288 + $0x38] sm:$0xff] %v1189
        %s1200 = sand.u32 %s161, 1
        %s1201 = scalar_lea.sflag [#allocation4], %s1200
        %s1202 = sand.u32 %s161, 1
        %s1203 = smul.addr %s1202, 64
        %s1204 = scalar_lea.vmem [#allocation8], %s1203
        // Predicated region
        $region57: #{tpu_custom_call.1} parent=43 // pred_check
          %p1205 = pneg %p171
        $region58: #{tpu_custom_call.1} parent=43 // pred_check_branch
          %1207 = sbr.rel (%p1205) target = $region60
        $region59: #{tpu_custom_call.1} parent=43 // pred_region
          %s1209 = ssub.s32 1024, 1024
          %1210 = vsyncadd %s1201, %s1209
          %s1211 = smul.addr %s22, 8
          %s1212 = smul.addr %s1211, 128
          %s1213 = scalar_lea.hbm %s6, %s1212
          %s1214 = sshll.u32 %s1204, 4
          %s1215 = int_to_ptr.vmem [resolvable:$true] %s1214
          %1220 = dma.vmem_to_hbm [thread:$0]  %s1215, 1024, %s1213, %s1201, 128, 128, 8
        $region60: #{tpu_custom_call.1} parent=43 // pred_fallthru
          _
      $region44: #{tpu_custom_call.1} parent=5 // pred_fallthru
        _
      %p1221 = scmp.le.s32.totalorder 2, %s17
      // Predicated region
      $region61: #{tpu_custom_call.1} parent=5 // pred_check
        %p1222 = pneg %p1221
      $region62: #{tpu_custom_call.1} parent=5 // pred_check_branch
        %1224 = sbr.rel (%p1222) target = $region64
      $region63: #{tpu_custom_call.1} parent=5 // pred_region
        %s1225 = ssub.s32 %s17, 2
        // Predicated region
        $region65: #{tpu_custom_call.1} parent=63 // pred_check
          %p1226 = pneg %p177
        $region66: #{tpu_custom_call.1} parent=63 // pred_check_branch
          %1228 = sbr.rel (%p1226) target = $region68
        $region67: #{tpu_custom_call.1} parent=63 // pred_region
          %s1229 = sand.u32 %s162, 1
          %s1230 = scalar_lea.sflag [#allocation4], %s1229
          %s1231 = sand.u32 %s162, 1
          %s1232 = smul.addr %s1231, 64
          %s1233 = scalar_lea.vmem [#allocation8], %s1232
          %1234 = dma.done %s1230, 1024
        $region68: #{tpu_custom_call.1} parent=63 // pred_fallthru
          _
      $region64: #{tpu_custom_call.1} parent=5 // pred_fallthru
        _
    $region6: #{tpu_custom_call.1} parent=1 // loop_footer
      %s21 = sadd.s32 1, %s17
    $region7: #{tpu_custom_call.1} parent=1 // loop_footer_branch
      %16 = sbr.rel target = $region3
    $region8: #{tpu_custom_call.1} parent=1 // loop_exit
      _
    %1235 = vsyncpa [#allocation3], 1
    %s1236 = scalar_lea.sflag [#allocation3], 1
    %1237 = vsyncpa %s1236, 1
    %1238 = vsyncpa [#allocation6], 1
    %1239 = vsyncpa [#allocation4], 1
    %s1240 = scalar_lea.sflag [#allocation4], 1
    %1241 = vsyncpa %s1240, 1

</llo_original>
